<compile_context>
chip_gen: v7x
topology: tpu7x:2x2x1
jax: 0.10.0
libtpu: 0.0.40
codegen_flags: <defaults>
</compile_context>

<pallas_src>
import functools

import jax
import jax.numpy as jnp
import numpy as np
from jax.experimental import pallas as pl
from jax.experimental.pallas import tpu as pltpu

K = 7     # conv kernel size
PAD = 3   # reflect padding on each side


def _conv7x7_kernel(x_ref, w_ref, b_ref, o_ref, *, Wp, Cin, L_out, Nb):
    """7x7 reflect-padded conv; one grid step processes Nb images.

    x_ref: (Nb, Cin, FLAT)   bf16, per-channel flattened padded image
                             (row stride Wp; FLAT >= 6*Wp + 6 + L_out)
    w_ref: (Cout, K*K*Cin)   bf16, columns ordered (kh, kw, ci)
    b_ref: (Cout, 1)         f32
    o_ref: (Nb, Cout, L_out) f32; valid outputs at p = h*Wp + w with w < W
    """
    w = w_ref[...]                       # (Cout, K*K*Cin) bf16
    b = b_ref[...]                       # (Cout, 1) f32
    cout = w.shape[0]

    for n in range(Nb):                  # static unroll over images in this step
        x = x_ref[n]                     # (Cin, FLAT) bf16, lane-dense
        acc = jnp.zeros((cout, L_out), jnp.float32)
        for kh in range(K):              # kh-chunked contraction: 7 chunks of depth K*Cin
            base = kh * Wp
            # 7 kw taps = 7 static lane-offset slices of the flat image.
            slabs = [x[:, base + kw: base + kw + L_out] for kw in range(K)]
            sub = jnp.concatenate(slabs, axis=0)                  # (K*Cin, L_out)
            w_kh = w[:, kh * K * Cin:(kh + 1) * K * Cin]          # (Cout, K*Cin)
            acc = acc + jnp.dot(w_kh, sub, preferred_element_type=jnp.float32)
        o_ref[n] = (acc + b).astype(o_ref.dtype)                  # bias broadcast over lanes


def _vmem_limit_bytes():
    # Raise the scoped-VMEM ceiling on 128-MiB parts (v5e/v6e); keep headroom
    # on v7x's 64-MiB physical VMEM.
    try:
        cap = int(pltpu.get_tpu_info().vmem_capacity_bytes)
    except Exception:
        cap = 64 * 1024 * 1024
    return min(100 * 1024 * 1024, (cap * 3) // 4)


def feature_map_block(x_nchw, weight, bias, *, images_per_step=None):
    """Conv2d(Cin, Cout, kernel_size=7, padding=3, padding_mode='reflect').

    x_nchw: (N, Cin, H, W)    float32
    weight: (Cout, Cin, 7, 7) float32 (PyTorch OIHW layout)
    bias:   (Cout,)           float32
    returns (N, Cout, H, W)   float32
    """
    N, Cin, H, W = x_nchw.shape
    Cout = weight.shape[0]
    if H <= PAD or W <= PAD:
        raise ValueError("reflect padding of 3 requires H, W >= 4")

    Hp, Wp = H + 2 * PAD, W + 2 * PAD
    L = H * Wp                            # flat output length per channel
    taps_over = (K - 1) * Wp + (K - 1)    # largest tap lane offset (6*Wp + 6)

    # Lane-dense output extent (multiple of 128 -> unmasked stores), provided
    # the extra reads it implies can be folded into reflect-padded bottom rows.
    L_out = ((L + 127) // 128) * 128
    rows_extra = -(-(taps_over + L_out - Hp * Wp) // Wp)
    if PAD + rows_extra > H - 1:          # reflect constraint would be violated
        L_out = L
        rows_extra = -(-(taps_over + L_out - Hp * Wp) // Wp)

    x_bf16 = x_nchw.astype(jnp.bfloat16)  # bf16 operands, f32 MXU accumulate
    if PAD + rows_extra <= H - 1:
        # Single reflect pad; the extra bottom rows cover the tap overshoot and
        # the lane rounding (they only feed output positions that get sliced
        # off), so there is no second constant-pad HBM pass.
        x_pad = jnp.pad(
            x_bf16,
            ((0, 0), (0, 0), (PAD, PAD + rows_extra), (PAD, PAD)),
            mode="reflect",
        )
        FLAT = (Hp + rows_extra) * Wp
        x_flat = x_pad.reshape(N, Cin, FLAT)          # metadata-only reshape
    else:
        # Pathologically small H (H == 4): tiny constant tail pad instead.
        x_pad = jnp.pad(
            x_bf16, ((0, 0), (0, 0), (PAD, PAD), (PAD, PAD)), mode="reflect"
        )
        FLAT = taps_over + L_out
        x_flat = jnp.pad(
            x_pad.reshape(N, Cin, Hp * Wp),
            ((0, 0), (0, 0), (0, FLAT - Hp * Wp)),
        )

    # Weights: (Cout, Cin, 7, 7) -> (Cout, (kh, kw, ci)) to match the sub-patch
    # row order (kw outer, ci inner within each kh chunk).
    w_mat = (
        jnp.transpose(weight, (0, 2, 3, 1))
        .reshape(Cout, K * K * Cin)
        .astype(jnp.bfloat16)
    )
    b_col = bias.reshape(Cout, 1).astype(jnp.float32)

    # Amortize the ~0.35us per-grid-step overhead for small images: several
    # images per step (capped so the static in-kernel unroll stays small).
    if images_per_step is None:
        per_img_bytes = Cin * FLAT * 2 + Cout * L_out * 4
        images_per_step = max(1, min(N, 8, (4 << 20) // max(per_img_bytes, 1)))
        while N % images_per_step:
            images_per_step -= 1
    Nb = images_per_step
    assert N % Nb == 0

    kernel = functools.partial(_conv7x7_kernel, Wp=Wp, Cin=Cin, L_out=L_out, Nb=Nb)

    out_flat = pl.pallas_call(
        kernel,
        out_shape=jax.ShapeDtypeStruct((N, Cout, L_out), x_nchw.dtype),
        grid_spec=pltpu.PrefetchScalarGridSpec(
            num_scalar_prefetch=0,
            grid=(N // Nb,),
            in_specs=[
                pl.BlockSpec((Nb, Cin, FLAT), lambda n: (n, 0, 0)),
                pl.BlockSpec((Cout, K * K * Cin), lambda n: (0, 0)),
                pl.BlockSpec((Cout, 1), lambda n: (0, 0)),
            ],
            out_specs=pl.BlockSpec((Nb, Cout, L_out), lambda n: (n, 0, 0)),
        ),
        compiler_params=pltpu.CompilerParams(
            dimension_semantics=("parallel",),
            vmem_limit_bytes=_vmem_limit_bytes(),
        ),
    )(x_flat, w_mat, b_col)

    # Drop the rounded lane tail -> (N, Cout, H, Wp) [metadata] -> drop pad
    # columns -> NCHW output.
    return out_flat[:, :, :L].reshape(N, Cout, H, Wp)[:, :, :, :W]


def _reference(x_nchw, weight, bias):
    """Pure-JAX reference (lax conv, full f32) for correctness check."""
    x_pad = jnp.pad(
        x_nchw, ((0, 0), (0, 0), (PAD, PAD), (PAD, PAD)), mode="reflect"
    )
    out = jax.lax.conv_general_dilated(
        x_pad, weight,
        window_strides=(1, 1),
        padding="VALID",
        dimension_numbers=("NCHW", "OIHW", "NCHW"),
        precision=jax.lax.Precision.HIGHEST,
    )
    return out + bias.reshape(1, -1, 1, 1)


if __name__ == "__main__":
    # FeatureMapBlock(input_channels=4, output_channels=8)
    N, Cin, H, W = 2, 4, 16, 16
    Cout = 8

    key = jax.random.PRNGKey(0)
    kx, kw, kb = jax.random.split(key, 3)

    x = jax.random.normal(kx, (N, Cin, H, W), dtype=jnp.float32)
    # deterministic synthetic params (PyTorch-like uniform fan-in init)
    fan_in = Cin * K * K
    bound = 1.0 / np.sqrt(fan_in)
    weight = jax.random.uniform(
        kw, (Cout, Cin, K, K), dtype=jnp.float32, minval=-bound, maxval=bound
    )
    bias = jax.random.uniform(
        kb, (Cout,), dtype=jnp.float32, minval=-bound, maxval=bound
    )

    out = jax.block_until_ready(feature_map_block(x, weight, bias))
    assert out.shape == (N, Cout, H, W), out.shape

    # Tight check: reference computed on the same bf16-rounded operands
    # (kernel does bf16 x bf16 -> f32 accumulate; only summation order differs).
    xq = x.astype(jnp.bfloat16).astype(jnp.float32)
    wq = weight.astype(jnp.bfloat16).astype(jnp.float32)
    ref_q = jax.block_until_ready(_reference(xq, wq, bias))
    np.testing.assert_allclose(np.asarray(out), np.asarray(ref_q),
                               rtol=1e-4, atol=1e-4)

    # Sanity check against the full-f32 module math (bf16-operand tolerance).
    ref = jax.block_until_ready(_reference(x, weight, bias))
    np.testing.assert_allclose(np.asarray(out), np.asarray(ref),
                               rtol=3e-2, atol=3e-2)

    print("KERNEL_OK")
</pallas_src>

<mosaic_0001>
module attributes {stable_mosaic.version = 11 : i64} {
  func.func @_conv7x7_kernel(%arg0: i32, %arg1: memref<2x4x528xbf16, #tpu.memory_space<vmem>>, %arg2: memref<8x196xbf16, #tpu.memory_space<vmem>>, %arg3: memref<8x1xf32, #tpu.memory_space<vmem>>, %arg4: memref<2x8x384xf32, #tpu.memory_space<vmem>>) attributes {dimension_semantics = [#tpu.dimension_semantics<parallel>], iteration_bounds = array<i64: 1>, scalar_prefetch = 0 : i64, scratch_operands = 0 : i64, tpu.core_type = #tpu.core_type<tc>, window_params = [{transform_indices = @transform_0, window_bounds = array<i64: 2, 4, 528>}, {pipeline_mode = #tpu.pipeline_mode<synchronous>, transform_indices = @transform_1, window_bounds = array<i64: 8, 196>}, {pipeline_mode = #tpu.pipeline_mode<synchronous>, transform_indices = @transform_2, window_bounds = array<i64: 8, 1>}, {transform_indices = @transform_3, window_bounds = array<i64: 2, 8, 384>}]} {
    %c0 = arith.constant 0 : index
    %c0_0 = arith.constant 0 : index
    %0 = vector.load %arg2[%c0, %c0_0] : memref<8x196xbf16, #tpu.memory_space<vmem>>, vector<8x196xbf16>
    %c0_1 = arith.constant 0 : index
    %c0_2 = arith.constant 0 : index
    %1 = vector.load %arg3[%c0_1, %c0_2] : memref<8x1xf32, #tpu.memory_space<vmem>>, vector<8x1xf32>
    %c0_3 = arith.constant 0 : index
    %c0_4 = arith.constant 0 : index
    %c0_5 = arith.constant 0 : index
    %2 = vector.load %arg1[%c0_3, %c0_4, %c0_5] : memref<2x4x528xbf16, #tpu.memory_space<vmem>>, vector<1x4x528xbf16>
    %3 = vector.shape_cast %2 : vector<1x4x528xbf16> to vector<4x528xbf16>
    %cst = arith.constant 0.000000e+00 : f32
    %4 = vector.broadcast %cst : f32 to vector<8x384xf32>
    %5 = vector.extract_strided_slice %3 {offsets = [0, 0], sizes = [4, 384], strides = [1, 1]} : vector<4x528xbf16> to vector<4x384xbf16>
    %6 = vector.extract_strided_slice %3 {offsets = [0, 1], sizes = [4, 384], strides = [1, 1]} : vector<4x528xbf16> to vector<4x384xbf16>
    %7 = vector.extract_strided_slice %3 {offsets = [0, 2], sizes = [4, 384], strides = [1, 1]} : vector<4x528xbf16> to vector<4x384xbf16>
    %8 = vector.extract_strided_slice %3 {offsets = [0, 3], sizes = [4, 384], strides = [1, 1]} : vector<4x528xbf16> to vector<4x384xbf16>
    %9 = vector.extract_strided_slice %3 {offsets = [0, 4], sizes = [4, 384], strides = [1, 1]} : vector<4x528xbf16> to vector<4x384xbf16>
    %10 = vector.extract_strided_slice %3 {offsets = [0, 5], sizes = [4, 384], strides = [1, 1]} : vector<4x528xbf16> to vector<4x384xbf16>
    %11 = vector.extract_strided_slice %3 {offsets = [0, 6], sizes = [4, 384], strides = [1, 1]} : vector<4x528xbf16> to vector<4x384xbf16>
    %12 = tpu.concatenate %5, %6, %7, %8, %9, %10, %11 in 0 : vector<4x384xbf16>, vector<4x384xbf16>, vector<4x384xbf16>, vector<4x384xbf16>, vector<4x384xbf16>, vector<4x384xbf16>, vector<4x384xbf16> -> vector<28x384xbf16>
    %13 = vector.extract_strided_slice %0 {offsets = [0, 0], sizes = [8, 28], strides = [1, 1]} : vector<8x196xbf16> to vector<8x28xbf16>
    %cst_6 = arith.constant dense<0.000000e+00> : vector<8x384xf32>
    %14 = tpu.matmul %13, %12, %cst_6 {dimension_numbers = #tpu.dot_dimension_numbers<[1], [0], [0], [1], [0, 0, 1, 1], [], []>} : vector<8x28xbf16>, vector<28x384xbf16>, vector<8x384xf32> -> vector<8x384xf32>
    %15 = arith.addf %4, %14 : vector<8x384xf32>
    %16 = vector.extract_strided_slice %3 {offsets = [0, 22], sizes = [4, 384], strides = [1, 1]} : vector<4x528xbf16> to vector<4x384xbf16>
    %17 = vector.extract_strided_slice %3 {offsets = [0, 23], sizes = [4, 384], strides = [1, 1]} : vector<4x528xbf16> to vector<4x384xbf16>
    %18 = vector.extract_strided_slice %3 {offsets = [0, 24], sizes = [4, 384], strides = [1, 1]} : vector<4x528xbf16> to vector<4x384xbf16>
    %19 = vector.extract_strided_slice %3 {offsets = [0, 25], sizes = [4, 384], strides = [1, 1]} : vector<4x528xbf16> to vector<4x384xbf16>
    %20 = vector.extract_strided_slice %3 {offsets = [0, 26], sizes = [4, 384], strides = [1, 1]} : vector<4x528xbf16> to vector<4x384xbf16>
    %21 = vector.extract_strided_slice %3 {offsets = [0, 27], sizes = [4, 384], strides = [1, 1]} : vector<4x528xbf16> to vector<4x384xbf16>
    %22 = vector.extract_strided_slice %3 {offsets = [0, 28], sizes = [4, 384], strides = [1, 1]} : vector<4x528xbf16> to vector<4x384xbf16>
    %23 = tpu.concatenate %16, %17, %18, %19, %20, %21, %22 in 0 : vector<4x384xbf16>, vector<4x384xbf16>, vector<4x384xbf16>, vector<4x384xbf16>, vector<4x384xbf16>, vector<4x384xbf16>, vector<4x384xbf16> -> vector<28x384xbf16>
    %24 = vector.extract_strided_slice %0 {offsets = [0, 28], sizes = [8, 28], strides = [1, 1]} : vector<8x196xbf16> to vector<8x28xbf16>
    %cst_7 = arith.constant dense<0.000000e+00> : vector<8x384xf32>
    %25 = tpu.matmul %24, %23, %cst_7 {dimension_numbers = #tpu.dot_dimension_numbers<[1], [0], [0], [1], [0, 0, 1, 1], [], []>} : vector<8x28xbf16>, vector<28x384xbf16>, vector<8x384xf32> -> vector<8x384xf32>
    %26 = arith.addf %15, %25 : vector<8x384xf32>
    %27 = vector.extract_strided_slice %3 {offsets = [0, 44], sizes = [4, 384], strides = [1, 1]} : vector<4x528xbf16> to vector<4x384xbf16>
    %28 = vector.extract_strided_slice %3 {offsets = [0, 45], sizes = [4, 384], strides = [1, 1]} : vector<4x528xbf16> to vector<4x384xbf16>
    %29 = vector.extract_strided_slice %3 {offsets = [0, 46], sizes = [4, 384], strides = [1, 1]} : vector<4x528xbf16> to vector<4x384xbf16>
    %30 = vector.extract_strided_slice %3 {offsets = [0, 47], sizes = [4, 384], strides = [1, 1]} : vector<4x528xbf16> to vector<4x384xbf16>
    %31 = vector.extract_strided_slice %3 {offsets = [0, 48], sizes = [4, 384], strides = [1, 1]} : vector<4x528xbf16> to vector<4x384xbf16>
    %32 = vector.extract_strided_slice %3 {offsets = [0, 49], sizes = [4, 384], strides = [1, 1]} : vector<4x528xbf16> to vector<4x384xbf16>
    %33 = vector.extract_strided_slice %3 {offsets = [0, 50], sizes = [4, 384], strides = [1, 1]} : vector<4x528xbf16> to vector<4x384xbf16>
    %34 = tpu.concatenate %27, %28, %29, %30, %31, %32, %33 in 0 : vector<4x384xbf16>, vector<4x384xbf16>, vector<4x384xbf16>, vector<4x384xbf16>, vector<4x384xbf16>, vector<4x384xbf16>, vector<4x384xbf16> -> vector<28x384xbf16>
    %35 = vector.extract_strided_slice %0 {offsets = [0, 56], sizes = [8, 28], strides = [1, 1]} : vector<8x196xbf16> to vector<8x28xbf16>
    %cst_8 = arith.constant dense<0.000000e+00> : vector<8x384xf32>
    %36 = tpu.matmul %35, %34, %cst_8 {dimension_numbers = #tpu.dot_dimension_numbers<[1], [0], [0], [1], [0, 0, 1, 1], [], []>} : vector<8x28xbf16>, vector<28x384xbf16>, vector<8x384xf32> -> vector<8x384xf32>
    %37 = arith.addf %26, %36 : vector<8x384xf32>
    %38 = vector.extract_strided_slice %3 {offsets = [0, 66], sizes = [4, 384], strides = [1, 1]} : vector<4x528xbf16> to vector<4x384xbf16>
    %39 = vector.extract_strided_slice %3 {offsets = [0, 67], sizes = [4, 384], strides = [1, 1]} : vector<4x528xbf16> to vector<4x384xbf16>
    %40 = vector.extract_strided_slice %3 {offsets = [0, 68], sizes = [4, 384], strides = [1, 1]} : vector<4x528xbf16> to vector<4x384xbf16>
    %41 = vector.extract_strided_slice %3 {offsets = [0, 69], sizes = [4, 384], strides = [1, 1]} : vector<4x528xbf16> to vector<4x384xbf16>
    %42 = vector.extract_strided_slice %3 {offsets = [0, 70], sizes = [4, 384], strides = [1, 1]} : vector<4x528xbf16> to vector<4x384xbf16>
    %43 = vector.extract_strided_slice %3 {offsets = [0, 71], sizes = [4, 384], strides = [1, 1]} : vector<4x528xbf16> to vector<4x384xbf16>
    %44 = vector.extract_strided_slice %3 {offsets = [0, 72], sizes = [4, 384], strides = [1, 1]} : vector<4x528xbf16> to vector<4x384xbf16>
    %45 = tpu.concatenate %38, %39, %40, %41, %42, %43, %44 in 0 : vector<4x384xbf16>, vector<4x384xbf16>, vector<4x384xbf16>, vector<4x384xbf16>, vector<4x384xbf16>, vector<4x384xbf16>, vector<4x384xbf16> -> vector<28x384xbf16>
    %46 = vector.extract_strided_slice %0 {offsets = [0, 84], sizes = [8, 28], strides = [1, 1]} : vector<8x196xbf16> to vector<8x28xbf16>
    %cst_9 = arith.constant dense<0.000000e+00> : vector<8x384xf32>
    %47 = tpu.matmul %46, %45, %cst_9 {dimension_numbers = #tpu.dot_dimension_numbers<[1], [0], [0], [1], [0, 0, 1, 1], [], []>} : vector<8x28xbf16>, vector<28x384xbf16>, vector<8x384xf32> -> vector<8x384xf32>
    %48 = arith.addf %37, %47 : vector<8x384xf32>
    %49 = vector.extract_strided_slice %3 {offsets = [0, 88], sizes = [4, 384], strides = [1, 1]} : vector<4x528xbf16> to vector<4x384xbf16>
    %50 = vector.extract_strided_slice %3 {offsets = [0, 89], sizes = [4, 384], strides = [1, 1]} : vector<4x528xbf16> to vector<4x384xbf16>
    %51 = vector.extract_strided_slice %3 {offsets = [0, 90], sizes = [4, 384], strides = [1, 1]} : vector<4x528xbf16> to vector<4x384xbf16>
    %52 = vector.extract_strided_slice %3 {offsets = [0, 91], sizes = [4, 384], strides = [1, 1]} : vector<4x528xbf16> to vector<4x384xbf16>
    %53 = vector.extract_strided_slice %3 {offsets = [0, 92], sizes = [4, 384], strides = [1, 1]} : vector<4x528xbf16> to vector<4x384xbf16>
    %54 = vector.extract_strided_slice %3 {offsets = [0, 93], sizes = [4, 384], strides = [1, 1]} : vector<4x528xbf16> to vector<4x384xbf16>
    %55 = vector.extract_strided_slice %3 {offsets = [0, 94], sizes = [4, 384], strides = [1, 1]} : vector<4x528xbf16> to vector<4x384xbf16>
    %56 = tpu.concatenate %49, %50, %51, %52, %53, %54, %55 in 0 : vector<4x384xbf16>, vector<4x384xbf16>, vector<4x384xbf16>, vector<4x384xbf16>, vector<4x384xbf16>, vector<4x384xbf16>, vector<4x384xbf16> -> vector<28x384xbf16>
    %57 = vector.extract_strided_slice %0 {offsets = [0, 112], sizes = [8, 28], strides = [1, 1]} : vector<8x196xbf16> to vector<8x28xbf16>
    %cst_10 = arith.constant dense<0.000000e+00> : vector<8x384xf32>
    %58 = tpu.matmul %57, %56, %cst_10 {dimension_numbers = #tpu.dot_dimension_numbers<[1], [0], [0], [1], [0, 0, 1, 1], [], []>} : vector<8x28xbf16>, vector<28x384xbf16>, vector<8x384xf32> -> vector<8x384xf32>
    %59 = arith.addf %48, %58 : vector<8x384xf32>
    %60 = vector.extract_strided_slice %3 {offsets = [0, 110], sizes = [4, 384], strides = [1, 1]} : vector<4x528xbf16> to vector<4x384xbf16>
    %61 = vector.extract_strided_slice %3 {offsets = [0, 111], sizes = [4, 384], strides = [1, 1]} : vector<4x528xbf16> to vector<4x384xbf16>
    %62 = vector.extract_strided_slice %3 {offsets = [0, 112], sizes = [4, 384], strides = [1, 1]} : vector<4x528xbf16> to vector<4x384xbf16>
    %63 = vector.extract_strided_slice %3 {offsets = [0, 113], sizes = [4, 384], strides = [1, 1]} : vector<4x528xbf16> to vector<4x384xbf16>
    %64 = vector.extract_strided_slice %3 {offsets = [0, 114], sizes = [4, 384], strides = [1, 1]} : vector<4x528xbf16> to vector<4x384xbf16>
    %65 = vector.extract_strided_slice %3 {offsets = [0, 115], sizes = [4, 384], strides = [1, 1]} : vector<4x528xbf16> to vector<4x384xbf16>
    %66 = vector.extract_strided_slice %3 {offsets = [0, 116], sizes = [4, 384], strides = [1, 1]} : vector<4x528xbf16> to vector<4x384xbf16>
    %67 = tpu.concatenate %60, %61, %62, %63, %64, %65, %66 in 0 : vector<4x384xbf16>, vector<4x384xbf16>, vector<4x384xbf16>, vector<4x384xbf16>, vector<4x384xbf16>, vector<4x384xbf16>, vector<4x384xbf16> -> vector<28x384xbf16>
    %68 = vector.extract_strided_slice %0 {offsets = [0, 140], sizes = [8, 28], strides = [1, 1]} : vector<8x196xbf16> to vector<8x28xbf16>
    %cst_11 = arith.constant dense<0.000000e+00> : vector<8x384xf32>
    %69 = tpu.matmul %68, %67, %cst_11 {dimension_numbers = #tpu.dot_dimension_numbers<[1], [0], [0], [1], [0, 0, 1, 1], [], []>} : vector<8x28xbf16>, vector<28x384xbf16>, vector<8x384xf32> -> vector<8x384xf32>
    %70 = arith.addf %59, %69 : vector<8x384xf32>
    %71 = vector.extract_strided_slice %3 {offsets = [0, 132], sizes = [4, 384], strides = [1, 1]} : vector<4x528xbf16> to vector<4x384xbf16>
    %72 = vector.extract_strided_slice %3 {offsets = [0, 133], sizes = [4, 384], strides = [1, 1]} : vector<4x528xbf16> to vector<4x384xbf16>
    %73 = vector.extract_strided_slice %3 {offsets = [0, 134], sizes = [4, 384], strides = [1, 1]} : vector<4x528xbf16> to vector<4x384xbf16>
    %74 = vector.extract_strided_slice %3 {offsets = [0, 135], sizes = [4, 384], strides = [1, 1]} : vector<4x528xbf16> to vector<4x384xbf16>
    %75 = vector.extract_strided_slice %3 {offsets = [0, 136], sizes = [4, 384], strides = [1, 1]} : vector<4x528xbf16> to vector<4x384xbf16>
    %76 = vector.extract_strided_slice %3 {offsets = [0, 137], sizes = [4, 384], strides = [1, 1]} : vector<4x528xbf16> to vector<4x384xbf16>
    %77 = vector.extract_strided_slice %3 {offsets = [0, 138], sizes = [4, 384], strides = [1, 1]} : vector<4x528xbf16> to vector<4x384xbf16>
    %78 = tpu.concatenate %71, %72, %73, %74, %75, %76, %77 in 0 : vector<4x384xbf16>, vector<4x384xbf16>, vector<4x384xbf16>, vector<4x384xbf16>, vector<4x384xbf16>, vector<4x384xbf16>, vector<4x384xbf16> -> vector<28x384xbf16>
    %79 = vector.extract_strided_slice %0 {offsets = [0, 168], sizes = [8, 28], strides = [1, 1]} : vector<8x196xbf16> to vector<8x28xbf16>
    %cst_12 = arith.constant dense<0.000000e+00> : vector<8x384xf32>
    %80 = tpu.matmul %79, %78, %cst_12 {dimension_numbers = #tpu.dot_dimension_numbers<[1], [0], [0], [1], [0, 0, 1, 1], [], []>} : vector<8x28xbf16>, vector<28x384xbf16>, vector<8x384xf32> -> vector<8x384xf32>
    %81 = arith.addf %70, %80 : vector<8x384xf32>
    %82 = vector.broadcast %1 : vector<8x1xf32> to vector<8x384xf32>
    %83 = arith.addf %81, %82 : vector<8x384xf32>
    %c0_13 = arith.constant 0 : index
    %c0_14 = arith.constant 0 : index
    %c0_15 = arith.constant 0 : index
    %84 = vector.load %arg4[%c0_13, %c0_14, %c0_15] : memref<2x8x384xf32, #tpu.memory_space<vmem>>, vector<1x8x384xf32>
    %85 = vector.shape_cast %84 : vector<1x8x384xf32> to vector<8x384xf32>
    %86 = vector.shape_cast %83 : vector<8x384xf32> to vector<1x8x384xf32>
    tpu.vector_store %arg4[%c0_13, %c0_14, %c0_15], %86 {strides = array<i32>} : memref<2x8x384xf32, #tpu.memory_space<vmem>>, vector<1x8x384xf32>,
    %c1 = arith.constant 1 : index
    %c0_16 = arith.constant 0 : index
    %c0_17 = arith.constant 0 : index
    %87 = vector.load %arg1[%c1, %c0_16, %c0_17] : memref<2x4x528xbf16, #tpu.memory_space<vmem>>, vector<1x4x528xbf16>
    %88 = vector.shape_cast %87 : vector<1x4x528xbf16> to vector<4x528xbf16>
    %cst_18 = arith.constant 0.000000e+00 : f32
    %89 = vector.broadcast %cst_18 : f32 to vector<8x384xf32>
    %90 = vector.extract_strided_slice %88 {offsets = [0, 0], sizes = [4, 384], strides = [1, 1]} : vector<4x528xbf16> to vector<4x384xbf16>
    %91 = vector.extract_strided_slice %88 {offsets = [0, 1], sizes = [4, 384], strides = [1, 1]} : vector<4x528xbf16> to vector<4x384xbf16>
    %92 = vector.extract_strided_slice %88 {offsets = [0, 2], sizes = [4, 384], strides = [1, 1]} : vector<4x528xbf16> to vector<4x384xbf16>
    %93 = vector.extract_strided_slice %88 {offsets = [0, 3], sizes = [4, 384], strides = [1, 1]} : vector<4x528xbf16> to vector<4x384xbf16>
    %94 = vector.extract_strided_slice %88 {offsets = [0, 4], sizes = [4, 384], strides = [1, 1]} : vector<4x528xbf16> to vector<4x384xbf16>
    %95 = vector.extract_strided_slice %88 {offsets = [0, 5], sizes = [4, 384], strides = [1, 1]} : vector<4x528xbf16> to vector<4x384xbf16>
    %96 = vector.extract_strided_slice %88 {offsets = [0, 6], sizes = [4, 384], strides = [1, 1]} : vector<4x528xbf16> to vector<4x384xbf16>
    %97 = tpu.concatenate %90, %91, %92, %93, %94, %95, %96 in 0 : vector<4x384xbf16>, vector<4x384xbf16>, vector<4x384xbf16>, vector<4x384xbf16>, vector<4x384xbf16>, vector<4x384xbf16>, vector<4x384xbf16> -> vector<28x384xbf16>
    %98 = vector.extract_strided_slice %0 {offsets = [0, 0], sizes = [8, 28], strides = [1, 1]} : vector<8x196xbf16> to vector<8x28xbf16>
    %cst_19 = arith.constant dense<0.000000e+00> : vector<8x384xf32>
    %99 = tpu.matmul %98, %97, %cst_19 {dimension_numbers = #tpu.dot_dimension_numbers<[1], [0], [0], [1], [0, 0, 1, 1], [], []>} : vector<8x28xbf16>, vector<28x384xbf16>, vector<8x384xf32> -> vector<8x384xf32>
    %100 = arith.addf %89, %99 : vector<8x384xf32>
    %101 = vector.extract_strided_slice %88 {offsets = [0, 22], sizes = [4, 384], strides = [1, 1]} : vector<4x528xbf16> to vector<4x384xbf16>
    %102 = vector.extract_strided_slice %88 {offsets = [0, 23], sizes = [4, 384], strides = [1, 1]} : vector<4x528xbf16> to vector<4x384xbf16>
    %103 = vector.extract_strided_slice %88 {offsets = [0, 24], sizes = [4, 384], strides = [1, 1]} : vector<4x528xbf16> to vector<4x384xbf16>
    %104 = vector.extract_strided_slice %88 {offsets = [0, 25], sizes = [4, 384], strides = [1, 1]} : vector<4x528xbf16> to vector<4x384xbf16>
    %105 = vector.extract_strided_slice %88 {offsets = [0, 26], sizes = [4, 384], strides = [1, 1]} : vector<4x528xbf16> to vector<4x384xbf16>
    %106 = vector.extract_strided_slice %88 {offsets = [0, 27], sizes = [4, 384], strides = [1, 1]} : vector<4x528xbf16> to vector<4x384xbf16>
    %107 = vector.extract_strided_slice %88 {offsets = [0, 28], sizes = [4, 384], strides = [1, 1]} : vector<4x528xbf16> to vector<4x384xbf16>
    %108 = tpu.concatenate %101, %102, %103, %104, %105, %106, %107 in 0 : vector<4x384xbf16>, vector<4x384xbf16>, vector<4x384xbf16>, vector<4x384xbf16>, vector<4x384xbf16>, vector<4x384xbf16>, vector<4x384xbf16> -> vector<28x384xbf16>
    %109 = vector.extract_strided_slice %0 {offsets = [0, 28], sizes = [8, 28], strides = [1, 1]} : vector<8x196xbf16> to vector<8x28xbf16>
    %cst_20 = arith.constant dense<0.000000e+00> : vector<8x384xf32>
    %110 = tpu.matmul %109, %108, %cst_20 {dimension_numbers = #tpu.dot_dimension_numbers<[1], [0], [0], [1], [0, 0, 1, 1], [], []>} : vector<8x28xbf16>, vector<28x384xbf16>, vector<8x384xf32> -> vector<8x384xf32>
    %111 = arith.addf %100, %110 : vector<8x384xf32>
    %112 = vector.extract_strided_slice %88 {offsets = [0, 44], sizes = [4, 384], strides = [1, 1]} : vector<4x528xbf16> to vector<4x384xbf16>
    %113 = vector.extract_strided_slice %88 {offsets = [0, 45], sizes = [4, 384], strides = [1, 1]} : vector<4x528xbf16> to vector<4x384xbf16>
    %114 = vector.extract_strided_slice %88 {offsets = [0, 46], sizes = [4, 384], strides = [1, 1]} : vector<4x528xbf16> to vector<4x384xbf16>
    %115 = vector.extract_strided_slice %88 {offsets = [0, 47], sizes = [4, 384], strides = [1, 1]} : vector<4x528xbf16> to vector<4x384xbf16>
    %116 = vector.extract_strided_slice %88 {offsets = [0, 48], sizes = [4, 384], strides = [1, 1]} : vector<4x528xbf16> to vector<4x384xbf16>
    %117 = vector.extract_strided_slice %88 {offsets = [0, 49], sizes = [4, 384], strides = [1, 1]} : vector<4x528xbf16> to vector<4x384xbf16>
    %118 = vector.extract_strided_slice %88 {offsets = [0, 50], sizes = [4, 384], strides = [1, 1]} : vector<4x528xbf16> to vector<4x384xbf16>
    %119 = tpu.concatenate %112, %113, %114, %115, %116, %117, %118 in 0 : vector<4x384xbf16>, vector<4x384xbf16>, vector<4x384xbf16>, vector<4x384xbf16>, vector<4x384xbf16>, vector<4x384xbf16>, vector<4x384xbf16> -> vector<28x384xbf16>
    %120 = vector.extract_strided_slice %0 {offsets = [0, 56], sizes = [8, 28], strides = [1, 1]} : vector<8x196xbf16> to vector<8x28xbf16>
    %cst_21 = arith.constant dense<0.000000e+00> : vector<8x384xf32>
    %121 = tpu.matmul %120, %119, %cst_21 {dimension_numbers = #tpu.dot_dimension_numbers<[1], [0], [0], [1], [0, 0, 1, 1], [], []>} : vector<8x28xbf16>, vector<28x384xbf16>, vector<8x384xf32> -> vector<8x384xf32>
    %122 = arith.addf %111, %121 : vector<8x384xf32>
    %123 = vector.extract_strided_slice %88 {offsets = [0, 66], sizes = [4, 384], strides = [1, 1]} : vector<4x528xbf16> to vector<4x384xbf16>
    %124 = vector.extract_strided_slice %88 {offsets = [0, 67], sizes = [4, 384], strides = [1, 1]} : vector<4x528xbf16> to vector<4x384xbf16>
    %125 = vector.extract_strided_slice %88 {offsets = [0, 68], sizes = [4, 384], strides = [1, 1]} : vector<4x528xbf16> to vector<4x384xbf16>
    %126 = vector.extract_strided_slice %88 {offsets = [0, 69], sizes = [4, 384], strides = [1, 1]} : vector<4x528xbf16> to vector<4x384xbf16>
    %127 = vector.extract_strided_slice %88 {offsets = [0, 70], sizes = [4, 384], strides = [1, 1]} : vector<4x528xbf16> to vector<4x384xbf16>
    %128 = vector.extract_strided_slice %88 {offsets = [0, 71], sizes = [4, 384], strides = [1, 1]} : vector<4x528xbf16> to vector<4x384xbf16>
    %129 = vector.extract_strided_slice %88 {offsets = [0, 72], sizes = [4, 384], strides = [1, 1]} : vector<4x528xbf16> to vector<4x384xbf16>
    %130 = tpu.concatenate %123, %124, %125, %126, %127, %128, %129 in 0 : vector<4x384xbf16>, vector<4x384xbf16>, vector<4x384xbf16>, vector<4x384xbf16>, vector<4x384xbf16>, vector<4x384xbf16>, vector<4x384xbf16> -> vector<28x384xbf16>
    %131 = vector.extract_strided_slice %0 {offsets = [0, 84], sizes = [8, 28], strides = [1, 1]} : vector<8x196xbf16> to vector<8x28xbf16>
    %cst_22 = arith.constant dense<0.000000e+00> : vector<8x384xf32>
    %132 = tpu.matmul %131, %130, %cst_22 {dimension_numbers = #tpu.dot_dimension_numbers<[1], [0], [0], [1], [0, 0, 1, 1], [], []>} : vector<8x28xbf16>, vector<28x384xbf16>, vector<8x384xf32> -> vector<8x384xf32>
    %133 = arith.addf %122, %132 : vector<8x384xf32>
    %134 = vector.extract_strided_slice %88 {offsets = [0, 88], sizes = [4, 384], strides = [1, 1]} : vector<4x528xbf16> to vector<4x384xbf16>
    %135 = vector.extract_strided_slice %88 {offsets = [0, 89], sizes = [4, 384], strides = [1, 1]} : vector<4x528xbf16> to vector<4x384xbf16>
    %136 = vector.extract_strided_slice %88 {offsets = [0, 90], sizes = [4, 384], strides = [1, 1]} : vector<4x528xbf16> to vector<4x384xbf16>
    %137 = vector.extract_strided_slice %88 {offsets = [0, 91], sizes = [4, 384], strides = [1, 1]} : vector<4x528xbf16> to vector<4x384xbf16>
    %138 = vector.extract_strided_slice %88 {offsets = [0, 92], sizes = [4, 384], strides = [1, 1]} : vector<4x528xbf16> to vector<4x384xbf16>
    %139 = vector.extract_strided_slice %88 {offsets = [0, 93], sizes = [4, 384], strides = [1, 1]} : vector<4x528xbf16> to vector<4x384xbf16>
    %140 = vector.extract_strided_slice %88 {offsets = [0, 94], sizes = [4, 384], strides = [1, 1]} : vector<4x528xbf16> to vector<4x384xbf16>
    %141 = tpu.concatenate %134, %135, %136, %137, %138, %139, %140 in 0 : vector<4x384xbf16>, vector<4x384xbf16>, vector<4x384xbf16>, vector<4x384xbf16>, vector<4x384xbf16>, vector<4x384xbf16>, vector<4x384xbf16> -> vector<28x384xbf16>
    %142 = vector.extract_strided_slice %0 {offsets = [0, 112], sizes = [8, 28], strides = [1, 1]} : vector<8x196xbf16> to vector<8x28xbf16>
    %cst_23 = arith.constant dense<0.000000e+00> : vector<8x384xf32>
    %143 = tpu.matmul %142, %141, %cst_23 {dimension_numbers = #tpu.dot_dimension_numbers<[1], [0], [0], [1], [0, 0, 1, 1], [], []>} : vector<8x28xbf16>, vector<28x384xbf16>, vector<8x384xf32> -> vector<8x384xf32>
    %144 = arith.addf %133, %143 : vector<8x384xf32>
    %145 = vector.extract_strided_slice %88 {offsets = [0, 110], sizes = [4, 384], strides = [1, 1]} : vector<4x528xbf16> to vector<4x384xbf16>
    %146 = vector.extract_strided_slice %88 {offsets = [0, 111], sizes = [4, 384], strides = [1, 1]} : vector<4x528xbf16> to vector<4x384xbf16>
    %147 = vector.extract_strided_slice %88 {offsets = [0, 112], sizes = [4, 384], strides = [1, 1]} : vector<4x528xbf16> to vector<4x384xbf16>
    %148 = vector.extract_strided_slice %88 {offsets = [0, 113], sizes = [4, 384], strides = [1, 1]} : vector<4x528xbf16> to vector<4x384xbf16>
    %149 = vector.extract_strided_slice %88 {offsets = [0, 114], sizes = [4, 384], strides = [1, 1]} : vector<4x528xbf16> to vector<4x384xbf16>
    %150 = vector.extract_strided_slice %88 {offsets = [0, 115], sizes = [4, 384], strides = [1, 1]} : vector<4x528xbf16> to vector<4x384xbf16>
    %151 = vector.extract_strided_slice %88 {offsets = [0, 116], sizes = [4, 384], strides = [1, 1]} : vector<4x528xbf16> to vector<4x384xbf16>
    %152 = tpu.concatenate %145, %146, %147, %148, %149, %150, %151 in 0 : vector<4x384xbf16>, vector<4x384xbf16>, vector<4x384xbf16>, vector<4x384xbf16>, vector<4x384xbf16>, vector<4x384xbf16>, vector<4x384xbf16> -> vector<28x384xbf16>
    %153 = vector.extract_strided_slice %0 {offsets = [0, 140], sizes = [8, 28], strides = [1, 1]} : vector<8x196xbf16> to vector<8x28xbf16>
    %cst_24 = arith.constant dense<0.000000e+00> : vector<8x384xf32>
    %154 = tpu.matmul %153, %152, %cst_24 {dimension_numbers = #tpu.dot_dimension_numbers<[1], [0], [0], [1], [0, 0, 1, 1], [], []>} : vector<8x28xbf16>, vector<28x384xbf16>, vector<8x384xf32> -> vector<8x384xf32>
    %155 = arith.addf %144, %154 : vector<8x384xf32>
    %156 = vector.extract_strided_slice %88 {offsets = [0, 132], sizes = [4, 384], strides = [1, 1]} : vector<4x528xbf16> to vector<4x384xbf16>
    %157 = vector.extract_strided_slice %88 {offsets = [0, 133], sizes = [4, 384], strides = [1, 1]} : vector<4x528xbf16> to vector<4x384xbf16>
    %158 = vector.extract_strided_slice %88 {offsets = [0, 134], sizes = [4, 384], strides = [1, 1]} : vector<4x528xbf16> to vector<4x384xbf16>
    %159 = vector.extract_strided_slice %88 {offsets = [0, 135], sizes = [4, 384], strides = [1, 1]} : vector<4x528xbf16> to vector<4x384xbf16>
    %160 = vector.extract_strided_slice %88 {offsets = [0, 136], sizes = [4, 384], strides = [1, 1]} : vector<4x528xbf16> to vector<4x384xbf16>
    %161 = vector.extract_strided_slice %88 {offsets = [0, 137], sizes = [4, 384], strides = [1, 1]} : vector<4x528xbf16> to vector<4x384xbf16>
    %162 = vector.extract_strided_slice %88 {offsets = [0, 138], sizes = [4, 384], strides = [1, 1]} : vector<4x528xbf16> to vector<4x384xbf16>
    %163 = tpu.concatenate %156, %157, %158, %159, %160, %161, %162 in 0 : vector<4x384xbf16>, vector<4x384xbf16>, vector<4x384xbf16>, vector<4x384xbf16>, vector<4x384xbf16>, vector<4x384xbf16>, vector<4x384xbf16> -> vector<28x384xbf16>
    %164 = vector.extract_strided_slice %0 {offsets = [0, 168], sizes = [8, 28], strides = [1, 1]} : vector<8x196xbf16> to vector<8x28xbf16>
    %cst_25 = arith.constant dense<0.000000e+00> : vector<8x384xf32>
    %165 = tpu.matmul %164, %163, %cst_25 {dimension_numbers = #tpu.dot_dimension_numbers<[1], [0], [0], [1], [0, 0, 1, 1], [], []>} : vector<8x28xbf16>, vector<28x384xbf16>, vector<8x384xf32> -> vector<8x384xf32>
    %166 = arith.addf %155, %165 : vector<8x384xf32>
    %167 = vector.broadcast %1 : vector<8x1xf32> to vector<8x384xf32>
    %168 = arith.addf %166, %167 : vector<8x384xf32>
    %c1_26 = arith.constant 1 : index
    %c0_27 = arith.constant 0 : index
    %c0_28 = arith.constant 0 : index
    %169 = vector.load %arg4[%c1_26, %c0_27, %c0_28] : memref<2x8x384xf32, #tpu.memory_space<vmem>>, vector<1x8x384xf32>
    %170 = vector.shape_cast %169 : vector<1x8x384xf32> to vector<8x384xf32>
    %171 = vector.shape_cast %168 : vector<8x384xf32> to vector<1x8x384xf32>
    tpu.vector_store %arg4[%c1_26, %c0_27, %c0_28], %171 {strides = array<i32>} : memref<2x8x384xf32, #tpu.memory_space<vmem>>, vector<1x8x384xf32>,
    return
  }
  func.func @transform_0(%arg0: i32) -> (i32, i32, i32) {
    %c0_i32 = arith.constant 0 : i32
    %c0_i32_0 = arith.constant 0 : i32
    %c0_i32_1 = arith.constant 0 : i32
    return %arg0, %c0_i32, %c0_i32_0 : i32, i32, i32
  }
  func.func @transform_1(%arg0: i32) -> (i32, i32) {
    %c0_i32 = arith.constant 0 : i32
    %c0_i32_0 = arith.constant 0 : i32
    %c0_i32_1 = arith.constant 0 : i32
    return %c0_i32, %c0_i32_0 : i32, i32
  }
  func.func @transform_2(%arg0: i32) -> (i32, i32) {
    %c0_i32 = arith.constant 0 : i32
    %c0_i32_0 = arith.constant 0 : i32
    %c0_i32_1 = arith.constant 0 : i32
    return %c0_i32, %c0_i32_0 : i32, i32
  }
  func.func @transform_3(%arg0: i32) -> (i32, i32, i32) {
    %c0_i32 = arith.constant 0 : i32
    %c0_i32_0 = arith.constant 0 : i32
    %c0_i32_1 = arith.constant 0 : i32
    return %arg0, %c0_i32, %c0_i32_0 : i32, i32, i32
  }
}

</mosaic_0001>

<llo_original>
// kernel: tpu_custom_call.1
$region0: #{tpu_custom_call.1}
  #allocation0 [shape = 'u32[]', space=smem, size = 0x4, offset = 0x4, fixed_abs, tag = 'smem constant byte address 0x4 - core index']
  #allocation1 [shape = 'u32[144,128]{1,0:T(1,128)}', space=vmem, size = 0x12000, scoped, tag = 'internal scratch']
  %s0 = inlined_call_operand.hbm [shape: bf16[2,4,528], index: 0, kind: input, shape index: {}]
  %s1 = inlined_call_operand.vmem [shape: bf16[8,196], index: 1, kind: input, shape index: {}]
  %s2 = inlined_call_operand.vmem [shape: f32[8,1], index: 2, kind: input, shape index: {}]
  %s3 = inlined_call_operand.hbm [shape: f32[2,8,384], index: 3, kind: output, shape index: {}]
  %s4 = sld [smem:[#allocation0]]
  $region26: #{tpu_custom_call.1} parent=0
    _
  %s6 = ssub.s32 1, %s4
  %s7 = scalar_select 0, %s6, %s4
  $region1: #{tpu_custom_call.1} parent=0
    #allocation2 [shape = 'u8[10240]{0}', space=vmem, size = 0x2800, scoped, tag = 'input window, operand 0, single buffered']
    #allocation3 [shape = 's32[1]{0}', space=sflag, size = 0x4, scoped, tag = 'scoped memory for tpu_custom_call.1']
    #allocation4 [shape = 's32[1]{0}', space=sflag, size = 0x4, scoped, tag = 'scoped memory for tpu_custom_call.1']
    #allocation5 [shape = 'u8[24576]{0}', space=vmem, size = 0x6000, scoped, tag = 'output window, operand 0, single buffered']
    %8 = vsyncpa [#allocation3], 0
    %9 = vsyncpa [#allocation4], 0
    // Predicated region
    $region2: #{tpu_custom_call.1} parent=1 // pred_check
      _
    $region3: #{tpu_custom_call.1} parent=1 // pred_check_branch
      %11 = sbr.rel (0) target = $region5
    $region4: #{tpu_custom_call.1} parent=1 // pred_region
      %s13 = ssub.s32 320, 320
      %14 = vsyncadd [#allocation3], %s13
      %s15 = sshll.u32 [#allocation2], 4
      %s16 = int_to_ptr.vmem [resolvable:$true] %s15
      %21 = dma.hbm_to_vmem [thread:$0]  %s0, 320, %s16, [#allocation3], 160, 160, 10
    $region5: #{tpu_custom_call.1} parent=1 // pred_fallthru
      _
    // Predicated region
    $region6: #{tpu_custom_call.1} parent=1 // pred_check
      _
    $region7: #{tpu_custom_call.1} parent=1 // pred_check_branch
      %23 = sbr.rel (0) target = $region9
    $region8: #{tpu_custom_call.1} parent=1 // pred_region
      _
    $region9: #{tpu_custom_call.1} parent=1 // pred_fallthru
      _
    // Predicated region
    $region10: #{tpu_custom_call.1} parent=1 // pred_check
      _
    $region11: #{tpu_custom_call.1} parent=1 // pred_check_branch
      %25 = sbr.rel (0) target = $region13
    $region12: #{tpu_custom_call.1} parent=1 // pred_region
      _
    $region13: #{tpu_custom_call.1} parent=1 // pred_fallthru
      _
    // Predicated region
    $region14: #{tpu_custom_call.1} parent=1 // pred_check
      _
    $region15: #{tpu_custom_call.1} parent=1 // pred_check_branch
      %27 = sbr.rel (0) target = $region17
    $region16: #{tpu_custom_call.1} parent=1 // pred_region
      %28 = dma.done [#allocation3], 320
    $region17: #{tpu_custom_call.1} parent=1 // pred_fallthru
      _
    %v30 = vld [vmem:[%s1] sm:$0xff]
    %v31 = vld [vmem:[%s2] sm:$0xff]
    %v32 = vld [vmem:[#allocation2] sm:$0xff]
    %v33 = vld [vmem:[#allocation2 + $0x8] sm:$0x3]
    %v35 = vcombine.high %v32, %v32
    %v37 = vunpack.c.l.s4 1983009808
    %v38 = vunpack.c.0.s8 %v37
    %v39 = vlaneseq
    %v40 = vshrl.u32 %v39, 7
    %v41 = vsub.s32 %v38, %v40
    %v42 = vrot.slane %v32, %v41
    %v44 = vunpack.c.l.s4 1983009808
    %v45 = vunpack.c.0.s8 %v44
    %v46 = vlaneseq
    %v47 = vshrl.u32 %v46, 7
    %v48 = vsub.s32 %v45, %v47
    %v49 = vrot.slane %v35, %v48
    %v50 = vcombine.high %v42, %v42
    %v51 = vcombine.low %v32, %v32
    %v53 = vunpack.c.l.s4 1983009808
    %v54 = vunpack.c.0.s8 %v53
    %v55 = vlaneseq
    %v56 = vshrl.u32 %v55, 7
    %v57 = vsub.s32 %v54, %v56
    %v58 = vrot.slane %v51, %v57
    %v59 = vcombine.high %v58, %v58
    %60 = vrot.lane.b32.xlu0 %v58, 127
    %v61 = vpop.permute.xlu0 %60
    %62 = vrot.lane.b32.xlu0 %v59, 127
    %v63 = vpop.permute.xlu0 %62
    %64 = vrot.lane.b32.xlu0 %v42, 127
    %v65 = vpop.permute.xlu0 %64
    %66 = vrot.lane.b32.xlu0 %v50, 127
    %v67 = vpop.permute.xlu0 %66
    %vm68 = vcmask 1039360
    %v69 = vsel %vm68, %v61, %v63
    %v70 = vsel %vm68, %v63, %v65
    %v71 = vsel %vm68, %v65, %v67
    %v72 = vcombine.low %v42, %v42
    %v73 = vcombine.low %v49, %v49
    %74 = vrot.lane.b32.xlu0 %v72, 126
    %v75 = vpop.permute.xlu0 %74
    %76 = vrot.lane.b32.xlu0 %v42, 126
    %v77 = vpop.permute.xlu0 %76
    %78 = vrot.lane.b32.xlu0 %v73, 126
    %v79 = vpop.permute.xlu0 %78
    %80 = vrot.lane.b32.xlu0 %v49, 126
    %v81 = vpop.permute.xlu0 %80
    %vm82 = vcmask 1031168
    %v83 = vsel %vm82, %v75, %v77
    %v84 = vsel %vm82, %v77, %v79
    %v85 = vsel %vm82, %v79, %v81
    %v86 = vcombine.low %v58, %v58
    %87 = vrot.lane.b32.xlu0 %v86, 125
    %v88 = vpop.permute.xlu0 %87
    %89 = vrot.lane.b32.xlu0 %v58, 125
    %v90 = vpop.permute.xlu0 %89
    %91 = vrot.lane.b32.xlu0 %v72, 125
    %v92 = vpop.permute.xlu0 %91
    %93 = vrot.lane.b32.xlu0 %v42, 125
    %v94 = vpop.permute.xlu0 %93
    %vm95 = vcmask 1022976
    %v96 = vsel %vm95, %v88, %v90
    %v97 = vsel %vm95, %v90, %v92
    %v98 = vsel %vm95, %v92, %v94
    %v99 = vcombine.high %v49, %v49
    %100 = vrot.lane.b32.xlu0 %v42, 124
    %v101 = vpop.permute.xlu0 %100
    %102 = vrot.lane.b32.xlu0 %v50, 124
    %v103 = vpop.permute.xlu0 %102
    %104 = vrot.lane.b32.xlu0 %v49, 124
    %v105 = vpop.permute.xlu0 %104
    %106 = vrot.lane.b32.xlu0 %v99, 124
    %v107 = vpop.permute.xlu0 %106
    %vm108 = vcmask 1014784
    %v109 = vsel %vm108, %v101, %v103
    %v110 = vsel %vm108, %v103, %v105
    %v111 = vsel %vm108, %v105, %v107
    %112 = vrot.lane.b32.xlu0 %v58, 123
    %v113 = vpop.permute.xlu0 %112
    %114 = vrot.lane.b32.xlu0 %v59, 123
    %v115 = vpop.permute.xlu0 %114
    %116 = vrot.lane.b32.xlu0 %v42, 123
    %v117 = vpop.permute.xlu0 %116
    %118 = vrot.lane.b32.xlu0 %v50, 123
    %v119 = vpop.permute.xlu0 %118
    %vm120 = vcmask 1006592
    %v121 = vsel %vm120, %v113, %v115
    %v122 = vsel %vm120, %v115, %v117
    %v123 = vsel %vm120, %v117, %v119
    %124 = vrot.lane.b32.xlu0 %v72, 122
    %v125 = vpop.permute.xlu0 %124
    %126 = vrot.lane.b32.xlu0 %v42, 122
    %v127 = vpop.permute.xlu0 %126
    %128 = vrot.lane.b32.xlu0 %v73, 122
    %v129 = vpop.permute.xlu0 %128
    %130 = vrot.lane.b32.xlu0 %v49, 122
    %v131 = vpop.permute.xlu0 %130
    %vm132 = vcmask 998400
    %v133 = vsel %vm132, %v125, %v127
    %v134 = vsel %vm132, %v127, %v129
    %v135 = vsel %vm132, %v129, %v131
    %vm136 = vcmask 1041408
    %v139 = vsel %vm136, %v42, %v69
    %v142 = vsel %vm136, %v50, %v70
    %v145 = vsel %vm136, %v49, %v71
    %vm146 = vcmask 1043456
    %v148 = vsel %vm146, %v139, %v83
    %v150 = vsel %vm146, %v142, %v84
    %v152 = vsel %vm146, %v145, %v85
    %vm153 = vcmask 1045504
    %v155 = vsel %vm153, %v148, %v96
    %v158 = vsel %vm153, %v150, %v97
    %v161 = vsel %vm153, %v152, %v98
    %v165 = vsel %vm136, %v109, %v121
    %v168 = vsel %vm136, %v110, %v122
    %v171 = vsel %vm136, %v111, %v123
    %v173 = vsel %vm146, %v165, %v133
    %v175 = vsel %vm146, %v168, %v134
    %v177 = vsel %vm146, %v171, %v135
    %v180 = vsel %vm136, %v99, %v67
    %v182 = vsel %vm146, %v180, %v81
    %v184 = vsel %vm153, %v182, %v94
    %v187 = vsel %vm136, %v107, %v119
    %v189 = vsel %vm146, %v187, %v131
    %v191 = vunpack.c.l.b16 %v30
    %v192 = vpack.c.b16 %v191, %v191
    %193 = vrot.lane.b32.xlu0 %v192, 100
    %v194 = vpop.permute.xlu0 %193
    %203 = vrot.lane.b32.xlu0 %v155, 106
    %v204 = vpop.permute.xlu0 %203
    %205 = vrot.lane.b32.xlu0 %v158, 106
    %v206 = vpop.permute.xlu0 %205
    %207 = vrot.lane.b32.xlu0 %v161, 106
    %v208 = vpop.permute.xlu0 %207
    %209 = vrot.lane.b32.xlu0 %v184, 106
    %v210 = vpop.permute.xlu0 %209
    %211 = vrot.lane.b32.xlu0 %v173, 106
    %v212 = vpop.permute.xlu0 %211
    %213 = vrot.lane.b32.xlu0 %v175, 106
    %v214 = vpop.permute.xlu0 %213
    %215 = vrot.lane.b32.xlu0 %v177, 106
    %v216 = vpop.permute.xlu0 %215
    %217 = vrot.lane.b32.xlu0 %v189, 106
    %v218 = vpop.permute.xlu0 %217
    %vm219 = vcmask 867328
    %v220 = vsel %vm219, %v204, %v206
    %v221 = vsel %vm219, %v206, %v208
    %v222 = vsel %vm219, %v208, %v210
    %v223 = vsel %vm219, %v212, %v214
    %v224 = vsel %vm219, %v214, %v216
    %v225 = vsel %vm219, %v216, %v218
    %vm229 = vcmask 228352
    %v231 = vsel %vm229, %v194, 0
    %v234 = vsel %vm153, %v223, 0
    %v237 = vsel %vm153, %v224, 0
    %v240 = vsel %vm153, %v225, 0
    %242 = vmatprep.subr.bf16.mxu0 %v221
    %243 = vmatpush1.bf16.msra.mxu0 %v220
    %244 = vmatprep.subr.bf16.mxu0 %v237
    %245 = vmatpush1.bf16.msra.mxu0 %v234
    %246 = vmatprep.subr.bf16.mxu0 0
    %247 = vmatpush1.bf16.msra.mxu0 0
    %248 = vmatprep.subr.bf16.mxu0 0
    %249 = vmatpush1.bf16.msra.mxu0 0
    %250 = vmatprep.subr.bf16.mxu0 0
    %251 = vmatpush1.bf16.msra.mxu0 0
    %252 = vmatprep.subr.bf16.mxu0 0
    %253 = vmatpush1.bf16.msra.mxu0 0
    %254 = vmatprep.subr.bf16.mxu0 0
    %255 = vmatpush1.bf16.msra.mxu0 0
    %256 = vmatprep.subr.bf16.mxu0 0
    %257 = vmatpush1.bf16.msra.mxu0 0
    %258 = vmatprep.subr.bf16.mxu0 0
    %259 = vmatpush1.bf16.msra.mxu0 0
    %260 = vmatprep.subr.bf16.mxu0 0
    %261 = vmatpush1.bf16.msra.mxu0 0
    %262 = vmatprep.subr.bf16.mxu0 0
    %263 = vmatpush1.bf16.msra.mxu0 0
    %264 = vmatprep.subr.bf16.mxu0 0
    %265 = vmatpush1.bf16.msra.mxu0 0
    %266 = vmatprep.subr.bf16.mxu0 0
    %267 = vmatpush1.bf16.msra.mxu0 0
    %268 = vmatprep.subr.bf16.mxu0 0
    %269 = vmatpush1.bf16.msra.mxu0 0
    %270 = vmatprep.subr.bf16.mxu0 0
    %271 = vmatpush1.bf16.msra.mxu0 0
    %272 = vmatprep.subr.bf16.mxu0 0
    %273 = vmatpush1.bf16.msra.mxu0 0
    %274 = vmatprep.mubr.bf16.mxu0 0
    %275 = vmatmul.mubr.bf16.gmra.mrb[0].mxu0 %v231
    %v276 = vpop.f32.mrb[0].mxu0
    %v277 = vadd.f32 0.0, %v276
    %v278 = vpop.f32.mrb[0].mxu0
    %v279 = vadd.f32 0.0, %v278
    %v280 = vpop.f32.mrb[0].mxu0
    %v281 = vpop.f32.mrb[0].mxu0
    %282 = vdwg.mxu0
    %283 = vmatprep.subr.bf16.mxu0 0
    %284 = vmatpush1.bf16.msra.mxu0 %v222
    %285 = vmatprep.subr.bf16.mxu0 0
    %286 = vmatpush1.bf16.msra.mxu0 %v240
    %287 = vmatprep.subr.bf16.mxu0 0
    %288 = vmatpush1.bf16.msra.mxu0 0
    %289 = vmatprep.subr.bf16.mxu0 0
    %290 = vmatpush1.bf16.msra.mxu0 0
    %291 = vmatprep.subr.bf16.mxu0 0
    %292 = vmatpush1.bf16.msra.mxu0 0
    %293 = vmatprep.subr.bf16.mxu0 0
    %294 = vmatpush1.bf16.msra.mxu0 0
    %295 = vmatprep.subr.bf16.mxu0 0
    %296 = vmatpush1.bf16.msra.mxu0 0
    %297 = vmatprep.subr.bf16.mxu0 0
    %298 = vmatpush1.bf16.msra.mxu0 0
    %299 = vmatprep.subr.bf16.mxu0 0
    %300 = vmatpush1.bf16.msra.mxu0 0
    %301 = vmatprep.subr.bf16.mxu0 0
    %302 = vmatpush1.bf16.msra.mxu0 0
    %303 = vmatprep.subr.bf16.mxu0 0
    %304 = vmatpush1.bf16.msra.mxu0 0
    %305 = vmatprep.subr.bf16.mxu0 0
    %306 = vmatpush1.bf16.msra.mxu0 0
    %307 = vmatprep.subr.bf16.mxu0 0
    %308 = vmatpush1.bf16.msra.mxu0 0
    %309 = vmatprep.subr.bf16.mxu0 0
    %310 = vmatpush1.bf16.msra.mxu0 0
    %311 = vmatprep.subr.bf16.mxu0 0
    %312 = vmatpush1.bf16.msra.mxu0 0
    %313 = vmatprep.subr.bf16.mxu0 0
    %314 = vmatpush1.bf16.msra.mxu0 0
    %315 = vmatprep.mubr.bf16.mxu0 0
    %316 = vmatmul.mubr.bf16.gmra.mrb[0].mxu0 %v231
    %v317 = vpop.f32.mrb[0].mxu0
    %v318 = vadd.f32 0.0, %v317
    %v319 = vpop.f32.mrb[0].mxu0
    %v320 = vpop.f32.mrb[0].mxu0
    %v321 = vpop.f32.mrb[0].mxu0
    %322 = vdwg.mxu0
    %v324 = vsel %vm229, %v30, 0
    %v326 = vsel %vm153, %v173, 0
    %v328 = vsel %vm153, %v175, 0
    %v330 = vsel %vm153, %v177, 0
    %332 = vmatprep.subr.bf16.mxu0 %v158
    %333 = vmatpush1.bf16.msra.mxu0 %v155
    %334 = vmatprep.subr.bf16.mxu0 %v328
    %335 = vmatpush1.bf16.msra.mxu0 %v326
    %336 = vmatprep.subr.bf16.mxu0 0
    %337 = vmatpush1.bf16.msra.mxu0 0
    %338 = vmatprep.subr.bf16.mxu0 0
    %339 = vmatpush1.bf16.msra.mxu0 0
    %340 = vmatprep.subr.bf16.mxu0 0
    %341 = vmatpush1.bf16.msra.mxu0 0
    %342 = vmatprep.subr.bf16.mxu0 0
    %343 = vmatpush1.bf16.msra.mxu0 0
    %344 = vmatprep.subr.bf16.mxu0 0
    %345 = vmatpush1.bf16.msra.mxu0 0
    %346 = vmatprep.subr.bf16.mxu0 0
    %347 = vmatpush1.bf16.msra.mxu0 0
    %348 = vmatprep.subr.bf16.mxu0 0
    %349 = vmatpush1.bf16.msra.mxu0 0
    %350 = vmatprep.subr.bf16.mxu0 0
    %351 = vmatpush1.bf16.msra.mxu0 0
    %352 = vmatprep.subr.bf16.mxu0 0
    %353 = vmatpush1.bf16.msra.mxu0 0
    %354 = vmatprep.subr.bf16.mxu0 0
    %355 = vmatpush1.bf16.msra.mxu0 0
    %356 = vmatprep.subr.bf16.mxu0 0
    %357 = vmatpush1.bf16.msra.mxu0 0
    %358 = vmatprep.subr.bf16.mxu0 0
    %359 = vmatpush1.bf16.msra.mxu0 0
    %360 = vmatprep.subr.bf16.mxu0 0
    %361 = vmatpush1.bf16.msra.mxu0 0
    %362 = vmatprep.subr.bf16.mxu0 0
    %363 = vmatpush1.bf16.msra.mxu0 0
    %364 = vmatprep.mubr.bf16.mxu0 0
    %365 = vmatmul.mubr.bf16.gmra.mrb[0].mxu0 %v324
    %v366 = vpop.f32.mrb[0].mxu0
    %v367 = vadd.f32 %v277, %v366
    %v368 = vpop.f32.mrb[0].mxu0
    %v369 = vadd.f32 %v279, %v368
    %v370 = vpop.f32.mrb[0].mxu0
    %v371 = vpop.f32.mrb[0].mxu0
    %372 = vdwg.mxu0
    %373 = vmatprep.subr.bf16.mxu0 0
    %374 = vmatpush1.bf16.msra.mxu0 %v161
    %375 = vmatprep.subr.bf16.mxu0 0
    %376 = vmatpush1.bf16.msra.mxu0 %v330
    %377 = vmatprep.subr.bf16.mxu0 0
    %378 = vmatpush1.bf16.msra.mxu0 0
    %379 = vmatprep.subr.bf16.mxu0 0
    %380 = vmatpush1.bf16.msra.mxu0 0
    %381 = vmatprep.subr.bf16.mxu0 0
    %382 = vmatpush1.bf16.msra.mxu0 0
    %383 = vmatprep.subr.bf16.mxu0 0
    %384 = vmatpush1.bf16.msra.mxu0 0
    %385 = vmatprep.subr.bf16.mxu0 0
    %386 = vmatpush1.bf16.msra.mxu0 0
    %387 = vmatprep.subr.bf16.mxu0 0
    %388 = vmatpush1.bf16.msra.mxu0 0
    %389 = vmatprep.subr.bf16.mxu0 0
    %390 = vmatpush1.bf16.msra.mxu0 0
    %391 = vmatprep.subr.bf16.mxu0 0
    %392 = vmatpush1.bf16.msra.mxu0 0
    %393 = vmatprep.subr.bf16.mxu0 0
    %394 = vmatpush1.bf16.msra.mxu0 0
    %395 = vmatprep.subr.bf16.mxu0 0
    %396 = vmatpush1.bf16.msra.mxu0 0
    %397 = vmatprep.subr.bf16.mxu0 0
    %398 = vmatpush1.bf16.msra.mxu0 0
    %399 = vmatprep.subr.bf16.mxu0 0
    %400 = vmatpush1.bf16.msra.mxu0 0
    %401 = vmatprep.subr.bf16.mxu0 0
    %402 = vmatpush1.bf16.msra.mxu0 0
    %403 = vmatprep.subr.bf16.mxu0 0
    %404 = vmatpush1.bf16.msra.mxu0 0
    %405 = vmatprep.mubr.bf16.mxu0 0
    %406 = vmatmul.mubr.bf16.gmra.mrb[0].mxu0 %v324
    %v407 = vpop.f32.mrb[0].mxu0
    %v408 = vadd.f32 %v318, %v407
    %v409 = vpop.f32.mrb[0].mxu0
    %v410 = vpop.f32.mrb[0].mxu0
    %v411 = vpop.f32.mrb[0].mxu0
    %412 = vdwg.mxu0
    %413 = vrot.lane.b32.xlu0 %v192, 72
    %v414 = vpop.permute.xlu0 %413
    %415 = vrot.lane.b32.xlu0 %v155, 84
    %v416 = vpop.permute.xlu0 %415
    %417 = vrot.lane.b32.xlu0 %v158, 84
    %v418 = vpop.permute.xlu0 %417
    %419 = vrot.lane.b32.xlu0 %v161, 84
    %v420 = vpop.permute.xlu0 %419
    %421 = vrot.lane.b32.xlu0 %v184, 84
    %v422 = vpop.permute.xlu0 %421
    %423 = vrot.lane.b32.xlu0 %v173, 84
    %v424 = vpop.permute.xlu0 %423
    %425 = vrot.lane.b32.xlu0 %v175, 84
    %v426 = vpop.permute.xlu0 %425
    %427 = vrot.lane.b32.xlu0 %v177, 84
    %v428 = vpop.permute.xlu0 %427
    %429 = vrot.lane.b32.xlu0 %v189, 84
    %v430 = vpop.permute.xlu0 %429
    %vm431 = vcmask 687104
    %v432 = vsel %vm431, %v416, %v418
    %v433 = vsel %vm431, %v418, %v420
    %v434 = vsel %vm431, %v420, %v422
    %v435 = vsel %vm431, %v424, %v426
    %v436 = vsel %vm431, %v426, %v428
    %v437 = vsel %vm431, %v428, %v430
    %v442 = vsel %vm229, %v414, 0
    %v445 = vsel %vm153, %v435, 0
    %v448 = vsel %vm153, %v436, 0
    %v451 = vsel %vm153, %v437, 0
    %453 = vmatprep.subr.bf16.mxu0 %v433
    %454 = vmatpush1.bf16.msra.mxu0 %v432
    %455 = vmatprep.subr.bf16.mxu0 %v448
    %456 = vmatpush1.bf16.msra.mxu0 %v445
    %457 = vmatprep.subr.bf16.mxu0 0
    %458 = vmatpush1.bf16.msra.mxu0 0
    %459 = vmatprep.subr.bf16.mxu0 0
    %460 = vmatpush1.bf16.msra.mxu0 0
    %461 = vmatprep.subr.bf16.mxu0 0
    %462 = vmatpush1.bf16.msra.mxu0 0
    %463 = vmatprep.subr.bf16.mxu0 0
    %464 = vmatpush1.bf16.msra.mxu0 0
    %465 = vmatprep.subr.bf16.mxu0 0
    %466 = vmatpush1.bf16.msra.mxu0 0
    %467 = vmatprep.subr.bf16.mxu0 0
    %468 = vmatpush1.bf16.msra.mxu0 0
    %469 = vmatprep.subr.bf16.mxu0 0
    %470 = vmatpush1.bf16.msra.mxu0 0
    %471 = vmatprep.subr.bf16.mxu0 0
    %472 = vmatpush1.bf16.msra.mxu0 0
    %473 = vmatprep.subr.bf16.mxu0 0
    %474 = vmatpush1.bf16.msra.mxu0 0
    %475 = vmatprep.subr.bf16.mxu0 0
    %476 = vmatpush1.bf16.msra.mxu0 0
    %477 = vmatprep.subr.bf16.mxu0 0
    %478 = vmatpush1.bf16.msra.mxu0 0
    %479 = vmatprep.subr.bf16.mxu0 0
    %480 = vmatpush1.bf16.msra.mxu0 0
    %481 = vmatprep.subr.bf16.mxu0 0
    %482 = vmatpush1.bf16.msra.mxu0 0
    %483 = vmatprep.subr.bf16.mxu0 0
    %484 = vmatpush1.bf16.msra.mxu0 0
    %485 = vmatprep.mubr.bf16.mxu0 0
    %486 = vmatmul.mubr.bf16.gmra.mrb[0].mxu0 %v442
    %v487 = vpop.f32.mrb[0].mxu0
    %v488 = vadd.f32 0.0, %v487
    %v489 = vpop.f32.mrb[0].mxu0
    %v490 = vadd.f32 0.0, %v489
    %v491 = vpop.f32.mrb[0].mxu0
    %v492 = vpop.f32.mrb[0].mxu0
    %493 = vdwg.mxu0
    %494 = vmatprep.subr.bf16.mxu0 0
    %495 = vmatpush1.bf16.msra.mxu0 %v434
    %496 = vmatprep.subr.bf16.mxu0 0
    %497 = vmatpush1.bf16.msra.mxu0 %v451
    %498 = vmatprep.subr.bf16.mxu0 0
    %499 = vmatpush1.bf16.msra.mxu0 0
    %500 = vmatprep.subr.bf16.mxu0 0
    %501 = vmatpush1.bf16.msra.mxu0 0
    %502 = vmatprep.subr.bf16.mxu0 0
    %503 = vmatpush1.bf16.msra.mxu0 0
    %504 = vmatprep.subr.bf16.mxu0 0
    %505 = vmatpush1.bf16.msra.mxu0 0
    %506 = vmatprep.subr.bf16.mxu0 0
    %507 = vmatpush1.bf16.msra.mxu0 0
    %508 = vmatprep.subr.bf16.mxu0 0
    %509 = vmatpush1.bf16.msra.mxu0 0
    %510 = vmatprep.subr.bf16.mxu0 0
    %511 = vmatpush1.bf16.msra.mxu0 0
    %512 = vmatprep.subr.bf16.mxu0 0
    %513 = vmatpush1.bf16.msra.mxu0 0
    %514 = vmatprep.subr.bf16.mxu0 0
    %515 = vmatpush1.bf16.msra.mxu0 0
    %516 = vmatprep.subr.bf16.mxu0 0
    %517 = vmatpush1.bf16.msra.mxu0 0
    %518 = vmatprep.subr.bf16.mxu0 0
    %519 = vmatpush1.bf16.msra.mxu0 0
    %520 = vmatprep.subr.bf16.mxu0 0
    %521 = vmatpush1.bf16.msra.mxu0 0
    %522 = vmatprep.subr.bf16.mxu0 0
    %523 = vmatpush1.bf16.msra.mxu0 0
    %524 = vmatprep.subr.bf16.mxu0 0
    %525 = vmatpush1.bf16.msra.mxu0 0
    %526 = vmatprep.mubr.bf16.mxu0 0
    %527 = vmatmul.mubr.bf16.gmra.mrb[0].mxu0 %v442
    %v528 = vpop.f32.mrb[0].mxu0
    %v529 = vadd.f32 0.0, %v528
    %v530 = vpop.f32.mrb[0].mxu0
    %v531 = vpop.f32.mrb[0].mxu0
    %v532 = vpop.f32.mrb[0].mxu0
    %533 = vdwg.mxu0
    %v534 = vadd.f32 %v367, %v488
    %v535 = vadd.f32 %v369, %v490
    %v536 = vadd.f32 %v408, %v529
    %537 = vrot.lane.b32.xlu0 %v192, 44
    %v538 = vpop.permute.xlu0 %537
    %539 = vrot.lane.b32.xlu0 %v155, 62
    %v540 = vpop.permute.xlu0 %539
    %541 = vrot.lane.b32.xlu0 %v158, 62
    %v542 = vpop.permute.xlu0 %541
    %543 = vrot.lane.b32.xlu0 %v161, 62
    %v544 = vpop.permute.xlu0 %543
    %545 = vrot.lane.b32.xlu0 %v184, 62
    %v546 = vpop.permute.xlu0 %545
    %547 = vrot.lane.b32.xlu0 %v173, 62
    %v548 = vpop.permute.xlu0 %547
    %549 = vrot.lane.b32.xlu0 %v175, 62
    %v550 = vpop.permute.xlu0 %549
    %551 = vrot.lane.b32.xlu0 %v177, 62
    %v552 = vpop.permute.xlu0 %551
    %553 = vrot.lane.b32.xlu0 %v189, 62
    %v554 = vpop.permute.xlu0 %553
    %vm555 = vcmask 506880
    %v556 = vsel %vm555, %v540, %v542
    %v557 = vsel %vm555, %v542, %v544
    %v558 = vsel %vm555, %v544, %v546
    %v559 = vsel %vm555, %v548, %v550
    %v560 = vsel %vm555, %v550, %v552
    %v561 = vsel %vm555, %v552, %v554
    %v566 = vsel %vm229, %v538, 0
    %v569 = vsel %vm153, %v559, 0
    %v572 = vsel %vm153, %v560, 0
    %v575 = vsel %vm153, %v561, 0
    %577 = vmatprep.subr.bf16.mxu0 %v557
    %578 = vmatpush1.bf16.msra.mxu0 %v556
    %579 = vmatprep.subr.bf16.mxu0 %v572
    %580 = vmatpush1.bf16.msra.mxu0 %v569
    %581 = vmatprep.subr.bf16.mxu0 0
    %582 = vmatpush1.bf16.msra.mxu0 0
    %583 = vmatprep.subr.bf16.mxu0 0
    %584 = vmatpush1.bf16.msra.mxu0 0
    %585 = vmatprep.subr.bf16.mxu0 0
    %586 = vmatpush1.bf16.msra.mxu0 0
    %587 = vmatprep.subr.bf16.mxu0 0
    %588 = vmatpush1.bf16.msra.mxu0 0
    %589 = vmatprep.subr.bf16.mxu0 0
    %590 = vmatpush1.bf16.msra.mxu0 0
    %591 = vmatprep.subr.bf16.mxu0 0
    %592 = vmatpush1.bf16.msra.mxu0 0
    %593 = vmatprep.subr.bf16.mxu0 0
    %594 = vmatpush1.bf16.msra.mxu0 0
    %595 = vmatprep.subr.bf16.mxu0 0
    %596 = vmatpush1.bf16.msra.mxu0 0
    %597 = vmatprep.subr.bf16.mxu0 0
    %598 = vmatpush1.bf16.msra.mxu0 0
    %599 = vmatprep.subr.bf16.mxu0 0
    %600 = vmatpush1.bf16.msra.mxu0 0
    %601 = vmatprep.subr.bf16.mxu0 0
    %602 = vmatpush1.bf16.msra.mxu0 0
    %603 = vmatprep.subr.bf16.mxu0 0
    %604 = vmatpush1.bf16.msra.mxu0 0
    %605 = vmatprep.subr.bf16.mxu0 0
    %606 = vmatpush1.bf16.msra.mxu0 0
    %607 = vmatprep.subr.bf16.mxu0 0
    %608 = vmatpush1.bf16.msra.mxu0 0
    %609 = vmatprep.mubr.bf16.mxu0 0
    %610 = vmatmul.mubr.bf16.gmra.mrb[0].mxu0 %v566
    %v611 = vpop.f32.mrb[0].mxu0
    %v612 = vadd.f32 0.0, %v611
    %v613 = vpop.f32.mrb[0].mxu0
    %v614 = vadd.f32 0.0, %v613
    %v615 = vpop.f32.mrb[0].mxu0
    %v616 = vpop.f32.mrb[0].mxu0
    %617 = vdwg.mxu0
    %618 = vmatprep.subr.bf16.mxu0 0
    %619 = vmatpush1.bf16.msra.mxu0 %v558
    %620 = vmatprep.subr.bf16.mxu0 0
    %621 = vmatpush1.bf16.msra.mxu0 %v575
    %622 = vmatprep.subr.bf16.mxu0 0
    %623 = vmatpush1.bf16.msra.mxu0 0
    %624 = vmatprep.subr.bf16.mxu0 0
    %625 = vmatpush1.bf16.msra.mxu0 0
    %626 = vmatprep.subr.bf16.mxu0 0
    %627 = vmatpush1.bf16.msra.mxu0 0
    %628 = vmatprep.subr.bf16.mxu0 0
    %629 = vmatpush1.bf16.msra.mxu0 0
    %630 = vmatprep.subr.bf16.mxu0 0
    %631 = vmatpush1.bf16.msra.mxu0 0
    %632 = vmatprep.subr.bf16.mxu0 0
    %633 = vmatpush1.bf16.msra.mxu0 0
    %634 = vmatprep.subr.bf16.mxu0 0
    %635 = vmatpush1.bf16.msra.mxu0 0
    %636 = vmatprep.subr.bf16.mxu0 0
    %637 = vmatpush1.bf16.msra.mxu0 0
    %638 = vmatprep.subr.bf16.mxu0 0
    %639 = vmatpush1.bf16.msra.mxu0 0
    %640 = vmatprep.subr.bf16.mxu0 0
    %641 = vmatpush1.bf16.msra.mxu0 0
    %642 = vmatprep.subr.bf16.mxu0 0
    %643 = vmatpush1.bf16.msra.mxu0 0
    %644 = vmatprep.subr.bf16.mxu0 0
    %645 = vmatpush1.bf16.msra.mxu0 0
    %646 = vmatprep.subr.bf16.mxu0 0
    %647 = vmatpush1.bf16.msra.mxu0 0
    %648 = vmatprep.subr.bf16.mxu0 0
    %649 = vmatpush1.bf16.msra.mxu0 0
    %650 = vmatprep.mubr.bf16.mxu0 0
    %651 = vmatmul.mubr.bf16.gmra.mrb[0].mxu0 %v566
    %v652 = vpop.f32.mrb[0].mxu0
    %v653 = vadd.f32 0.0, %v652
    %v654 = vpop.f32.mrb[0].mxu0
    %v655 = vpop.f32.mrb[0].mxu0
    %v656 = vpop.f32.mrb[0].mxu0
    %657 = vdwg.mxu0
    %v658 = vadd.f32 %v534, %v612
    %v659 = vadd.f32 %v535, %v614
    %v660 = vadd.f32 %v536, %v653
    %v661 = vunpack.c.h.b16 %v30
    %v662 = vpack.c.b16 %v661, %v661
    %663 = vrot.lane.b32.xlu0 %v192, 16
    %v664 = vpop.permute.xlu0 %663
    %665 = vrot.lane.b32.xlu0 %v662, 16
    %v666 = vpop.permute.xlu0 %665
    %vm667 = vcmask 130048
    %v668 = vsel %vm667, %v664, %v666
    %669 = vrot.lane.b32.xlu0 %v155, 40
    %v670 = vpop.permute.xlu0 %669
    %671 = vrot.lane.b32.xlu0 %v158, 40
    %v672 = vpop.permute.xlu0 %671
    %673 = vrot.lane.b32.xlu0 %v161, 40
    %v674 = vpop.permute.xlu0 %673
    %675 = vrot.lane.b32.xlu0 %v184, 40
    %v676 = vpop.permute.xlu0 %675
    %677 = vrot.lane.b32.xlu0 %v173, 40
    %v678 = vpop.permute.xlu0 %677
    %679 = vrot.lane.b32.xlu0 %v175, 40
    %v680 = vpop.permute.xlu0 %679
    %681 = vrot.lane.b32.xlu0 %v177, 40
    %v682 = vpop.permute.xlu0 %681
    %683 = vrot.lane.b32.xlu0 %v189, 40
    %v684 = vpop.permute.xlu0 %683
    %vm685 = vcmask 326656
    %v686 = vsel %vm685, %v670, %v672
    %v687 = vsel %vm685, %v672, %v674
    %v688 = vsel %vm685, %v674, %v676
    %v689 = vsel %vm685, %v678, %v680
    %v690 = vsel %vm685, %v680, %v682
    %v691 = vsel %vm685, %v682, %v684
    %v696 = vsel %vm229, %v668, 0
    %v699 = vsel %vm153, %v689, 0
    %v702 = vsel %vm153, %v690, 0
    %v705 = vsel %vm153, %v691, 0
    %707 = vmatprep.subr.bf16.mxu0 %v687
    %708 = vmatpush1.bf16.msra.mxu0 %v686
    %709 = vmatprep.subr.bf16.mxu0 %v702
    %710 = vmatpush1.bf16.msra.mxu0 %v699
    %711 = vmatprep.subr.bf16.mxu0 0
    %712 = vmatpush1.bf16.msra.mxu0 0
    %713 = vmatprep.subr.bf16.mxu0 0
    %714 = vmatpush1.bf16.msra.mxu0 0
    %715 = vmatprep.subr.bf16.mxu0 0
    %716 = vmatpush1.bf16.msra.mxu0 0
    %717 = vmatprep.subr.bf16.mxu0 0
    %718 = vmatpush1.bf16.msra.mxu0 0
    %719 = vmatprep.subr.bf16.mxu0 0
    %720 = vmatpush1.bf16.msra.mxu0 0
    %721 = vmatprep.subr.bf16.mxu0 0
    %722 = vmatpush1.bf16.msra.mxu0 0
    %723 = vmatprep.subr.bf16.mxu0 0
    %724 = vmatpush1.bf16.msra.mxu0 0
    %725 = vmatprep.subr.bf16.mxu0 0
    %726 = vmatpush1.bf16.msra.mxu0 0
    %727 = vmatprep.subr.bf16.mxu0 0
    %728 = vmatpush1.bf16.msra.mxu0 0
    %729 = vmatprep.subr.bf16.mxu0 0
    %730 = vmatpush1.bf16.msra.mxu0 0
    %731 = vmatprep.subr.bf16.mxu0 0
    %732 = vmatpush1.bf16.msra.mxu0 0
    %733 = vmatprep.subr.bf16.mxu0 0
    %734 = vmatpush1.bf16.msra.mxu0 0
    %735 = vmatprep.subr.bf16.mxu0 0
    %736 = vmatpush1.bf16.msra.mxu0 0
    %737 = vmatprep.subr.bf16.mxu0 0
    %738 = vmatpush1.bf16.msra.mxu0 0
    %739 = vmatprep.mubr.bf16.mxu0 0
    %740 = vmatmul.mubr.bf16.gmra.mrb[0].mxu0 %v696
    %v741 = vpop.f32.mrb[0].mxu0
    %v742 = vadd.f32 0.0, %v741
    %v743 = vpop.f32.mrb[0].mxu0
    %v744 = vadd.f32 0.0, %v743
    %v745 = vpop.f32.mrb[0].mxu0
    %v746 = vpop.f32.mrb[0].mxu0
    %747 = vdwg.mxu0
    %748 = vmatprep.subr.bf16.mxu0 0
    %749 = vmatpush1.bf16.msra.mxu0 %v688
    %750 = vmatprep.subr.bf16.mxu0 0
    %751 = vmatpush1.bf16.msra.mxu0 %v705
    %752 = vmatprep.subr.bf16.mxu0 0
    %753 = vmatpush1.bf16.msra.mxu0 0
    %754 = vmatprep.subr.bf16.mxu0 0
    %755 = vmatpush1.bf16.msra.mxu0 0
    %756 = vmatprep.subr.bf16.mxu0 0
    %757 = vmatpush1.bf16.msra.mxu0 0
    %758 = vmatprep.subr.bf16.mxu0 0
    %759 = vmatpush1.bf16.msra.mxu0 0
    %760 = vmatprep.subr.bf16.mxu0 0
    %761 = vmatpush1.bf16.msra.mxu0 0
    %762 = vmatprep.subr.bf16.mxu0 0
    %763 = vmatpush1.bf16.msra.mxu0 0
    %764 = vmatprep.subr.bf16.mxu0 0
    %765 = vmatpush1.bf16.msra.mxu0 0
    %766 = vmatprep.subr.bf16.mxu0 0
    %767 = vmatpush1.bf16.msra.mxu0 0
    %768 = vmatprep.subr.bf16.mxu0 0
    %769 = vmatpush1.bf16.msra.mxu0 0
    %770 = vmatprep.subr.bf16.mxu0 0
    %771 = vmatpush1.bf16.msra.mxu0 0
    %772 = vmatprep.subr.bf16.mxu0 0
    %773 = vmatpush1.bf16.msra.mxu0 0
    %774 = vmatprep.subr.bf16.mxu0 0
    %775 = vmatpush1.bf16.msra.mxu0 0
    %776 = vmatprep.subr.bf16.mxu0 0
    %777 = vmatpush1.bf16.msra.mxu0 0
    %778 = vmatprep.subr.bf16.mxu0 0
    %779 = vmatpush1.bf16.msra.mxu0 0
    %780 = vmatprep.mubr.bf16.mxu0 0
    %781 = vmatmul.mubr.bf16.gmra.mrb[0].mxu0 %v696
    %v782 = vpop.f32.mrb[0].mxu0
    %v783 = vadd.f32 0.0, %v782
    %v784 = vpop.f32.mrb[0].mxu0
    %v785 = vpop.f32.mrb[0].mxu0
    %v786 = vpop.f32.mrb[0].mxu0
    %787 = vdwg.mxu0
    %v788 = vadd.f32 %v658, %v742
    %v789 = vadd.f32 %v659, %v744
    %v790 = vadd.f32 %v660, %v783
    %791 = vrot.lane.b32.xlu0 %v662, 116
    %v792 = vpop.permute.xlu0 %791
    %793 = vrot.lane.b32.xlu0 %v155, 18
    %v794 = vpop.permute.xlu0 %793
    %795 = vrot.lane.b32.xlu0 %v158, 18
    %v796 = vpop.permute.xlu0 %795
    %797 = vrot.lane.b32.xlu0 %v161, 18
    %v798 = vpop.permute.xlu0 %797
    %799 = vrot.lane.b32.xlu0 %v184, 18
    %v800 = vpop.permute.xlu0 %799
    %801 = vrot.lane.b32.xlu0 %v173, 18
    %v802 = vpop.permute.xlu0 %801
    %803 = vrot.lane.b32.xlu0 %v175, 18
    %v804 = vpop.permute.xlu0 %803
    %805 = vrot.lane.b32.xlu0 %v177, 18
    %v806 = vpop.permute.xlu0 %805
    %807 = vrot.lane.b32.xlu0 %v189, 18
    %v808 = vpop.permute.xlu0 %807
    %vm809 = vcmask 146432
    %v810 = vsel %vm809, %v794, %v796
    %v811 = vsel %vm809, %v796, %v798
    %v812 = vsel %vm809, %v798, %v800
    %v813 = vsel %vm809, %v802, %v804
    %v814 = vsel %vm809, %v804, %v806
    %v815 = vsel %vm809, %v806, %v808
    %v820 = vsel %vm229, %v792, 0
    %v823 = vsel %vm153, %v813, 0
    %v826 = vsel %vm153, %v814, 0
    %v829 = vsel %vm153, %v815, 0
    %831 = vmatprep.subr.bf16.mxu0 %v811
    %832 = vmatpush1.bf16.msra.mxu0 %v810
    %833 = vmatprep.subr.bf16.mxu0 %v826
    %834 = vmatpush1.bf16.msra.mxu0 %v823
    %835 = vmatprep.subr.bf16.mxu0 0
    %836 = vmatpush1.bf16.msra.mxu0 0
    %837 = vmatprep.subr.bf16.mxu0 0
    %838 = vmatpush1.bf16.msra.mxu0 0
    %839 = vmatprep.subr.bf16.mxu0 0
    %840 = vmatpush1.bf16.msra.mxu0 0
    %841 = vmatprep.subr.bf16.mxu0 0
    %842 = vmatpush1.bf16.msra.mxu0 0
    %843 = vmatprep.subr.bf16.mxu0 0
    %844 = vmatpush1.bf16.msra.mxu0 0
    %845 = vmatprep.subr.bf16.mxu0 0
    %846 = vmatpush1.bf16.msra.mxu0 0
    %847 = vmatprep.subr.bf16.mxu0 0
    %848 = vmatpush1.bf16.msra.mxu0 0
    %849 = vmatprep.subr.bf16.mxu0 0
    %850 = vmatpush1.bf16.msra.mxu0 0
    %851 = vmatprep.subr.bf16.mxu0 0
    %852 = vmatpush1.bf16.msra.mxu0 0
    %853 = vmatprep.subr.bf16.mxu0 0
    %854 = vmatpush1.bf16.msra.mxu0 0
    %855 = vmatprep.subr.bf16.mxu0 0
    %856 = vmatpush1.bf16.msra.mxu0 0
    %857 = vmatprep.subr.bf16.mxu0 0
    %858 = vmatpush1.bf16.msra.mxu0 0
    %859 = vmatprep.subr.bf16.mxu0 0
    %860 = vmatpush1.bf16.msra.mxu0 0
    %861 = vmatprep.subr.bf16.mxu0 0
    %862 = vmatpush1.bf16.msra.mxu0 0
    %863 = vmatprep.mubr.bf16.mxu0 0
    %864 = vmatmul.mubr.bf16.gmra.mrb[0].mxu0 %v820
    %v865 = vpop.f32.mrb[0].mxu0
    %v866 = vadd.f32 0.0, %v865
    %v867 = vpop.f32.mrb[0].mxu0
    %v868 = vadd.f32 0.0, %v867
    %v869 = vpop.f32.mrb[0].mxu0
    %v870 = vpop.f32.mrb[0].mxu0
    %871 = vdwg.mxu0
    %872 = vmatprep.subr.bf16.mxu0 0
    %873 = vmatpush1.bf16.msra.mxu0 %v812
    %874 = vmatprep.subr.bf16.mxu0 0
    %875 = vmatpush1.bf16.msra.mxu0 %v829
    %876 = vmatprep.subr.bf16.mxu0 0
    %877 = vmatpush1.bf16.msra.mxu0 0
    %878 = vmatprep.subr.bf16.mxu0 0
    %879 = vmatpush1.bf16.msra.mxu0 0
    %880 = vmatprep.subr.bf16.mxu0 0
    %881 = vmatpush1.bf16.msra.mxu0 0
    %882 = vmatprep.subr.bf16.mxu0 0
    %883 = vmatpush1.bf16.msra.mxu0 0
    %884 = vmatprep.subr.bf16.mxu0 0
    %885 = vmatpush1.bf16.msra.mxu0 0
    %886 = vmatprep.subr.bf16.mxu0 0
    %887 = vmatpush1.bf16.msra.mxu0 0
    %888 = vmatprep.subr.bf16.mxu0 0
    %889 = vmatpush1.bf16.msra.mxu0 0
    %890 = vmatprep.subr.bf16.mxu0 0
    %891 = vmatpush1.bf16.msra.mxu0 0
    %892 = vmatprep.subr.bf16.mxu0 0
    %893 = vmatpush1.bf16.msra.mxu0 0
    %894 = vmatprep.subr.bf16.mxu0 0
    %895 = vmatpush1.bf16.msra.mxu0 0
    %896 = vmatprep.subr.bf16.mxu0 0
    %897 = vmatpush1.bf16.msra.mxu0 0
    %898 = vmatprep.subr.bf16.mxu0 0
    %899 = vmatpush1.bf16.msra.mxu0 0
    %900 = vmatprep.subr.bf16.mxu0 0
    %901 = vmatpush1.bf16.msra.mxu0 0
    %902 = vmatprep.subr.bf16.mxu0 0
    %903 = vmatpush1.bf16.msra.mxu0 0
    %904 = vmatprep.mubr.bf16.mxu0 0
    %905 = vmatmul.mubr.bf16.gmra.mrb[0].mxu0 %v820
    %v906 = vpop.f32.mrb[0].mxu0
    %v907 = vadd.f32 0.0, %v906
    %v908 = vpop.f32.mrb[0].mxu0
    %v909 = vpop.f32.mrb[0].mxu0
    %v910 = vpop.f32.mrb[0].mxu0
    %911 = vdwg.mxu0
    %v912 = vadd.f32 %v788, %v866
    %v913 = vadd.f32 %v789, %v868
    %v914 = vadd.f32 %v790, %v907
    %v917 = vunpack.c.l.s4 1983009808
    %v918 = vunpack.c.0.s8 %v917
    %v919 = vlaneseq
    %v920 = vshrl.u32 %v919, 7
    %v921 = vsub.s32 %v918, %v920
    %v922 = vrot.slane %v33, %v921
    %923 = vrot.lane.b32.xlu0 %v922, 124
    %v924 = vpop.permute.xlu0 %923
    %v925 = vsel %vm108, %v107, %v924
    %v926 = vcombine.low %v33, %v33
    %v928 = vunpack.c.l.s4 1983009808
    %v929 = vunpack.c.0.s8 %v928
    %v930 = vlaneseq
    %v931 = vshrl.u32 %v930, 7
    %v932 = vsub.s32 %v929, %v931
    %v933 = vrot.slane %v926, %v932
    %934 = vrot.lane.b32.xlu0 %v933, 123
    %v935 = vpop.permute.xlu0 %934
    %v936 = vsel %vm120, %v119, %v935
    %v937 = vcombine.low %v922, %v922
    %938 = vrot.lane.b32.xlu0 %v937, 122
    %v939 = vpop.permute.xlu0 %938
    %v940 = vsel %vm132, %v131, %v939
    %v941 = vcombine.low %v933, %v933
    %942 = vrot.lane.b32.xlu0 %v58, 121
    %v943 = vpop.permute.xlu0 %942
    %944 = vrot.lane.b32.xlu0 %v72, 121
    %v945 = vpop.permute.xlu0 %944
    %946 = vrot.lane.b32.xlu0 %v42, 121
    %v947 = vpop.permute.xlu0 %946
    %948 = vrot.lane.b32.xlu0 %v941, 121
    %v949 = vpop.permute.xlu0 %948
    %vm950 = vcmask 990208
    %v951 = vsel %vm950, %v943, %v945
    %v952 = vsel %vm950, %v945, %v947
    %v953 = vsel %vm950, %v947, %v949
    %954 = vrot.lane.b32.xlu0 %v50, 120
    %v955 = vpop.permute.xlu0 %954
    %956 = vrot.lane.b32.xlu0 %v49, 120
    %v957 = vpop.permute.xlu0 %956
    %958 = vrot.lane.b32.xlu0 %v99, 120
    %v959 = vpop.permute.xlu0 %958
    %960 = vrot.lane.b32.xlu0 %v922, 120
    %v961 = vpop.permute.xlu0 %960
    %vm962 = vcmask 982016
    %v963 = vsel %vm962, %v955, %v957
    %v964 = vsel %vm962, %v957, %v959
    %v965 = vsel %vm962, %v959, %v961
    %966 = vrot.lane.b32.xlu0 %v59, 119
    %v967 = vpop.permute.xlu0 %966
    %968 = vrot.lane.b32.xlu0 %v42, 119
    %v969 = vpop.permute.xlu0 %968
    %970 = vrot.lane.b32.xlu0 %v50, 119
    %v971 = vpop.permute.xlu0 %970
    %972 = vrot.lane.b32.xlu0 %v933, 119
    %v973 = vpop.permute.xlu0 %972
    %vm974 = vcmask 973824
    %v975 = vsel %vm974, %v967, %v969
    %v976 = vsel %vm974, %v969, %v971
    %v977 = vsel %vm974, %v971, %v973
    %978 = vrot.lane.b32.xlu0 %v42, 118
    %v979 = vpop.permute.xlu0 %978
    %980 = vrot.lane.b32.xlu0 %v73, 118
    %v981 = vpop.permute.xlu0 %980
    %982 = vrot.lane.b32.xlu0 %v49, 118
    %v983 = vpop.permute.xlu0 %982
    %984 = vrot.lane.b32.xlu0 %v937, 118
    %v985 = vpop.permute.xlu0 %984
    %vm986 = vcmask 965632
    %v987 = vsel %vm986, %v979, %v981
    %v988 = vsel %vm986, %v981, %v983
    %v989 = vsel %vm986, %v983, %v985
    %v992 = vsel %vm136, %v925, %v936
    %v994 = vsel %vm146, %v992, %v940
    %v996 = vsel %vm153, %v175, %v951
    %v999 = vsel %vm153, %v177, %v952
    %v1002 = vsel %vm153, %v994, %v953
    %v1006 = vsel %vm136, %v963, %v975
    %v1009 = vsel %vm136, %v964, %v976
    %v1012 = vsel %vm136, %v965, %v977
    %v1014 = vsel %vm146, %v1006, %v987
    %v1016 = vsel %vm146, %v1009, %v988
    %v1018 = vsel %vm146, %v1012, %v989
    %1019 = vrot.lane.b32.xlu0 %v662, 88
    %v1020 = vpop.permute.xlu0 %1019
    %v1022 = vsel %vm229, %v1020, 0
    %v1024 = vsel %vm153, %v1014, 0
    %v1026 = vsel %vm153, %v1016, 0
    %v1028 = vsel %vm153, %v1018, 0
    %1030 = vmatprep.subr.bf16.mxu0 %v999
    %1031 = vmatpush1.bf16.msra.mxu0 %v996
    %1032 = vmatprep.subr.bf16.mxu0 %v1026
    %1033 = vmatpush1.bf16.msra.mxu0 %v1024
    %1034 = vmatprep.subr.bf16.mxu0 0
    %1035 = vmatpush1.bf16.msra.mxu0 0
    %1036 = vmatprep.subr.bf16.mxu0 0
    %1037 = vmatpush1.bf16.msra.mxu0 0
    %1038 = vmatprep.subr.bf16.mxu0 0
    %1039 = vmatpush1.bf16.msra.mxu0 0
    %1040 = vmatprep.subr.bf16.mxu0 0
    %1041 = vmatpush1.bf16.msra.mxu0 0
    %1042 = vmatprep.subr.bf16.mxu0 0
    %1043 = vmatpush1.bf16.msra.mxu0 0
    %1044 = vmatprep.subr.bf16.mxu0 0
    %1045 = vmatpush1.bf16.msra.mxu0 0
    %1046 = vmatprep.subr.bf16.mxu0 0
    %1047 = vmatpush1.bf16.msra.mxu0 0
    %1048 = vmatprep.subr.bf16.mxu0 0
    %1049 = vmatpush1.bf16.msra.mxu0 0
    %1050 = vmatprep.subr.bf16.mxu0 0
    %1051 = vmatpush1.bf16.msra.mxu0 0
    %1052 = vmatprep.subr.bf16.mxu0 0
    %1053 = vmatpush1.bf16.msra.mxu0 0
    %1054 = vmatprep.subr.bf16.mxu0 0
    %1055 = vmatpush1.bf16.msra.mxu0 0
    %1056 = vmatprep.subr.bf16.mxu0 0
    %1057 = vmatpush1.bf16.msra.mxu0 0
    %1058 = vmatprep.subr.bf16.mxu0 0
    %1059 = vmatpush1.bf16.msra.mxu0 0
    %1060 = vmatprep.subr.bf16.mxu0 0
    %1061 = vmatpush1.bf16.msra.mxu0 0
    %1062 = vmatprep.mubr.bf16.mxu0 0
    %1063 = vmatmul.mubr.bf16.gmra.mrb[0].mxu0 %v1022
    %v1064 = vpop.f32.mrb[0].mxu0
    %v1065 = vadd.f32 0.0, %v1064
    %v1066 = vpop.f32.mrb[0].mxu0
    %v1067 = vadd.f32 0.0, %v1066
    %v1068 = vpop.f32.mrb[0].mxu0
    %v1069 = vpop.f32.mrb[0].mxu0
    %1070 = vdwg.mxu0
    %1071 = vmatprep.subr.bf16.mxu0 0
    %1072 = vmatpush1.bf16.msra.mxu0 %v1002
    %1073 = vmatprep.subr.bf16.mxu0 0
    %1074 = vmatpush1.bf16.msra.mxu0 %v1028
    %1075 = vmatprep.subr.bf16.mxu0 0
    %1076 = vmatpush1.bf16.msra.mxu0 0
    %1077 = vmatprep.subr.bf16.mxu0 0
    %1078 = vmatpush1.bf16.msra.mxu0 0
    %1079 = vmatprep.subr.bf16.mxu0 0
    %1080 = vmatpush1.bf16.msra.mxu0 0
    %1081 = vmatprep.subr.bf16.mxu0 0
    %1082 = vmatpush1.bf16.msra.mxu0 0
    %1083 = vmatprep.subr.bf16.mxu0 0
    %1084 = vmatpush1.bf16.msra.mxu0 0
    %1085 = vmatprep.subr.bf16.mxu0 0
    %1086 = vmatpush1.bf16.msra.mxu0 0
    %1087 = vmatprep.subr.bf16.mxu0 0
    %1088 = vmatpush1.bf16.msra.mxu0 0
    %1089 = vmatprep.subr.bf16.mxu0 0
    %1090 = vmatpush1.bf16.msra.mxu0 0
    %1091 = vmatprep.subr.bf16.mxu0 0
    %1092 = vmatpush1.bf16.msra.mxu0 0
    %1093 = vmatprep.subr.bf16.mxu0 0
    %1094 = vmatpush1.bf16.msra.mxu0 0
    %1095 = vmatprep.subr.bf16.mxu0 0
    %1096 = vmatpush1.bf16.msra.mxu0 0
    %1097 = vmatprep.subr.bf16.mxu0 0
    %1098 = vmatpush1.bf16.msra.mxu0 0
    %1099 = vmatprep.subr.bf16.mxu0 0
    %1100 = vmatpush1.bf16.msra.mxu0 0
    %1101 = vmatprep.subr.bf16.mxu0 0
    %1102 = vmatpush1.bf16.msra.mxu0 0
    %1103 = vmatprep.mubr.bf16.mxu0 0
    %1104 = vmatmul.mubr.bf16.gmra.mrb[0].mxu0 %v1022
    %v1105 = vpop.f32.mrb[0].mxu0
    %v1106 = vadd.f32 0.0, %v1105
    %v1107 = vpop.f32.mrb[0].mxu0
    %v1108 = vpop.f32.mrb[0].mxu0
    %v1109 = vpop.f32.mrb[0].mxu0
    %1110 = vdwg.mxu0
    %v1111 = vadd.f32 %v912, %v1065
    %v1112 = vadd.f32 %v913, %v1067
    %v1113 = vadd.f32 %v914, %v1106
    %1115 = vset.pattern.permute.xlu0 0
    %1116 = vperm.xlu0 %1115, %v31
    %v1117 = vpop.permute.xlu0 %1116
    %v1119 = vadd.f32 %v1111, %v1117
    %v1120 = vadd.f32 %v1112, %v1117
    %v1121 = vadd.f32 %v1113, %v1117
    %1122 = vst [vmem:[#allocation5] sm:$0xff] %v1119
    %1123 = vst [vmem:[#allocation5 + $0x8] sm:$0xff] %v1120
    %1124 = vst [vmem:[#allocation5 + $0x10] sm:$0xff] %v1121
    %s1125 = scalar_lea.vmem [#allocation2], 10
    %v1126 = vld [vmem:[%s1125] sm:$0xff]
    %v1127 = vld [vmem:[%s1125 + $0x8] sm:$0x3]
    %v1129 = vcombine.high %v1126, %v1126
    %v1131 = vunpack.c.l.s4 1983009808
    %v1132 = vunpack.c.0.s8 %v1131
    %v1133 = vlaneseq
    %v1134 = vshrl.u32 %v1133, 7
    %v1135 = vsub.s32 %v1132, %v1134
    %v1136 = vrot.slane %v1126, %v1135
    %v1138 = vunpack.c.l.s4 1983009808
    %v1139 = vunpack.c.0.s8 %v1138
    %v1140 = vlaneseq
    %v1141 = vshrl.u32 %v1140, 7
    %v1142 = vsub.s32 %v1139, %v1141
    %v1143 = vrot.slane %v1129, %v1142
    %v1144 = vcombine.high %v1136, %v1136
    %v1145 = vcombine.low %v1126, %v1126
    %v1147 = vunpack.c.l.s4 1983009808
    %v1148 = vunpack.c.0.s8 %v1147
    %v1149 = vlaneseq
    %v1150 = vshrl.u32 %v1149, 7
    %v1151 = vsub.s32 %v1148, %v1150
    %v1152 = vrot.slane %v1145, %v1151
    %v1153 = vcombine.high %v1152, %v1152
    %1154 = vrot.lane.b32.xlu0 %v1152, 127
    %v1155 = vpop.permute.xlu0 %1154
    %1156 = vrot.lane.b32.xlu0 %v1153, 127
    %v1157 = vpop.permute.xlu0 %1156
    %1158 = vrot.lane.b32.xlu0 %v1136, 127
    %v1159 = vpop.permute.xlu0 %1158
    %1160 = vrot.lane.b32.xlu0 %v1144, 127
    %v1161 = vpop.permute.xlu0 %1160
    %v1162 = vsel %vm68, %v1155, %v1157
    %v1163 = vsel %vm68, %v1157, %v1159
    %v1164 = vsel %vm68, %v1159, %v1161
    %v1165 = vcombine.low %v1136, %v1136
    %v1166 = vcombine.low %v1143, %v1143
    %1167 = vrot.lane.b32.xlu0 %v1165, 126
    %v1168 = vpop.permute.xlu0 %1167
    %1169 = vrot.lane.b32.xlu0 %v1136, 126
    %v1170 = vpop.permute.xlu0 %1169
    %1171 = vrot.lane.b32.xlu0 %v1166, 126
    %v1172 = vpop.permute.xlu0 %1171
    %1173 = vrot.lane.b32.xlu0 %v1143, 126
    %v1174 = vpop.permute.xlu0 %1173
    %v1175 = vsel %vm82, %v1168, %v1170
    %v1176 = vsel %vm82, %v1170, %v1172
    %v1177 = vsel %vm82, %v1172, %v1174
    %v1178 = vcombine.low %v1152, %v1152
    %1179 = vrot.lane.b32.xlu0 %v1178, 125
    %v1180 = vpop.permute.xlu0 %1179
    %1181 = vrot.lane.b32.xlu0 %v1152, 125
    %v1182 = vpop.permute.xlu0 %1181
    %1183 = vrot.lane.b32.xlu0 %v1165, 125
    %v1184 = vpop.permute.xlu0 %1183
    %1185 = vrot.lane.b32.xlu0 %v1136, 125
    %v1186 = vpop.permute.xlu0 %1185
    %v1187 = vsel %vm95, %v1180, %v1182
    %v1188 = vsel %vm95, %v1182, %v1184
    %v1189 = vsel %vm95, %v1184, %v1186
    %v1190 = vcombine.high %v1143, %v1143
    %1191 = vrot.lane.b32.xlu0 %v1136, 124
    %v1192 = vpop.permute.xlu0 %1191
    %1193 = vrot.lane.b32.xlu0 %v1144, 124
    %v1194 = vpop.permute.xlu0 %1193
    %1195 = vrot.lane.b32.xlu0 %v1143, 124
    %v1196 = vpop.permute.xlu0 %1195
    %1197 = vrot.lane.b32.xlu0 %v1190, 124
    %v1198 = vpop.permute.xlu0 %1197
    %v1199 = vsel %vm108, %v1192, %v1194
    %v1200 = vsel %vm108, %v1194, %v1196
    %v1201 = vsel %vm108, %v1196, %v1198
    %1202 = vrot.lane.b32.xlu0 %v1152, 123
    %v1203 = vpop.permute.xlu0 %1202
    %1204 = vrot.lane.b32.xlu0 %v1153, 123
    %v1205 = vpop.permute.xlu0 %1204
    %1206 = vrot.lane.b32.xlu0 %v1136, 123
    %v1207 = vpop.permute.xlu0 %1206
    %1208 = vrot.lane.b32.xlu0 %v1144, 123
    %v1209 = vpop.permute.xlu0 %1208
    %v1210 = vsel %vm120, %v1203, %v1205
    %v1211 = vsel %vm120, %v1205, %v1207
    %v1212 = vsel %vm120, %v1207, %v1209
    %1213 = vrot.lane.b32.xlu0 %v1165, 122
    %v1214 = vpop.permute.xlu0 %1213
    %1215 = vrot.lane.b32.xlu0 %v1136, 122
    %v1216 = vpop.permute.xlu0 %1215
    %1217 = vrot.lane.b32.xlu0 %v1166, 122
    %v1218 = vpop.permute.xlu0 %1217
    %1219 = vrot.lane.b32.xlu0 %v1143, 122
    %v1220 = vpop.permute.xlu0 %1219
    %v1221 = vsel %vm132, %v1214, %v1216
    %v1222 = vsel %vm132, %v1216, %v1218
    %v1223 = vsel %vm132, %v1218, %v1220
    %v1226 = vsel %vm136, %v1136, %v1162
    %v1229 = vsel %vm136, %v1144, %v1163
    %v1232 = vsel %vm136, %v1143, %v1164
    %v1234 = vsel %vm146, %v1226, %v1175
    %v1236 = vsel %vm146, %v1229, %v1176
    %v1238 = vsel %vm146, %v1232, %v1177
    %v1240 = vsel %vm153, %v1234, %v1187
    %v1243 = vsel %vm153, %v1236, %v1188
    %v1246 = vsel %vm153, %v1238, %v1189
    %v1250 = vsel %vm136, %v1199, %v1210
    %v1253 = vsel %vm136, %v1200, %v1211
    %v1256 = vsel %vm136, %v1201, %v1212
    %v1258 = vsel %vm146, %v1250, %v1221
    %v1260 = vsel %vm146, %v1253, %v1222
    %v1262 = vsel %vm146, %v1256, %v1223
    %v1265 = vsel %vm136, %v1190, %v1161
    %v1267 = vsel %vm146, %v1265, %v1174
    %v1269 = vsel %vm153, %v1267, %v1186
    %v1272 = vsel %vm136, %v1198, %v1209
    %v1274 = vsel %vm146, %v1272, %v1220
    %1283 = vrot.lane.b32.xlu0 %v1240, 106
    %v1284 = vpop.permute.xlu0 %1283
    %1285 = vrot.lane.b32.xlu0 %v1243, 106
    %v1286 = vpop.permute.xlu0 %1285
    %1287 = vrot.lane.b32.xlu0 %v1246, 106
    %v1288 = vpop.permute.xlu0 %1287
    %1289 = vrot.lane.b32.xlu0 %v1269, 106
    %v1290 = vpop.permute.xlu0 %1289
    %1291 = vrot.lane.b32.xlu0 %v1258, 106
    %v1292 = vpop.permute.xlu0 %1291
    %1293 = vrot.lane.b32.xlu0 %v1260, 106
    %v1294 = vpop.permute.xlu0 %1293
    %1295 = vrot.lane.b32.xlu0 %v1262, 106
    %v1296 = vpop.permute.xlu0 %1295
    %1297 = vrot.lane.b32.xlu0 %v1274, 106
    %v1298 = vpop.permute.xlu0 %1297
    %v1299 = vsel %vm219, %v1284, %v1286
    %v1300 = vsel %vm219, %v1286, %v1288
    %v1301 = vsel %vm219, %v1288, %v1290
    %v1302 = vsel %vm219, %v1292, %v1294
    %v1303 = vsel %vm219, %v1294, %v1296
    %v1304 = vsel %vm219, %v1296, %v1298
    %v1309 = vsel %vm153, %v1302, 0
    %v1312 = vsel %vm153, %v1303, 0
    %v1315 = vsel %vm153, %v1304, 0
    %1317 = vmatprep.subr.bf16.mxu0 %v1300
    %1318 = vmatpush1.bf16.msra.mxu0 %v1299
    %1319 = vmatprep.subr.bf16.mxu0 %v1312
    %1320 = vmatpush1.bf16.msra.mxu0 %v1309
    %1321 = vmatprep.subr.bf16.mxu0 0
    %1322 = vmatpush1.bf16.msra.mxu0 0
    %1323 = vmatprep.subr.bf16.mxu0 0
    %1324 = vmatpush1.bf16.msra.mxu0 0
    %1325 = vmatprep.subr.bf16.mxu0 0
    %1326 = vmatpush1.bf16.msra.mxu0 0
    %1327 = vmatprep.subr.bf16.mxu0 0
    %1328 = vmatpush1.bf16.msra.mxu0 0
    %1329 = vmatprep.subr.bf16.mxu0 0
    %1330 = vmatpush1.bf16.msra.mxu0 0
    %1331 = vmatprep.subr.bf16.mxu0 0
    %1332 = vmatpush1.bf16.msra.mxu0 0
    %1333 = vmatprep.subr.bf16.mxu0 0
    %1334 = vmatpush1.bf16.msra.mxu0 0
    %1335 = vmatprep.subr.bf16.mxu0 0
    %1336 = vmatpush1.bf16.msra.mxu0 0
    %1337 = vmatprep.subr.bf16.mxu0 0
    %1338 = vmatpush1.bf16.msra.mxu0 0
    %1339 = vmatprep.subr.bf16.mxu0 0
    %1340 = vmatpush1.bf16.msra.mxu0 0
    %1341 = vmatprep.subr.bf16.mxu0 0
    %1342 = vmatpush1.bf16.msra.mxu0 0
    %1343 = vmatprep.subr.bf16.mxu0 0
    %1344 = vmatpush1.bf16.msra.mxu0 0
    %1345 = vmatprep.subr.bf16.mxu0 0
    %1346 = vmatpush1.bf16.msra.mxu0 0
    %1347 = vmatprep.subr.bf16.mxu0 0
    %1348 = vmatpush1.bf16.msra.mxu0 0
    %1349 = vmatprep.mubr.bf16.mxu0 0
    %1350 = vmatmul.mubr.bf16.gmra.mrb[0].mxu0 %v231
    %v1351 = vpop.f32.mrb[0].mxu0
    %v1352 = vadd.f32 0.0, %v1351
    %v1353 = vpop.f32.mrb[0].mxu0
    %v1354 = vadd.f32 0.0, %v1353
    %v1355 = vpop.f32.mrb[0].mxu0
    %v1356 = vpop.f32.mrb[0].mxu0
    %1357 = vdwg.mxu0
    %1358 = vmatprep.subr.bf16.mxu0 0
    %1359 = vmatpush1.bf16.msra.mxu0 %v1301
    %1360 = vmatprep.subr.bf16.mxu0 0
    %1361 = vmatpush1.bf16.msra.mxu0 %v1315
    %1362 = vmatprep.subr.bf16.mxu0 0
    %1363 = vmatpush1.bf16.msra.mxu0 0
    %1364 = vmatprep.subr.bf16.mxu0 0
    %1365 = vmatpush1.bf16.msra.mxu0 0
    %1366 = vmatprep.subr.bf16.mxu0 0
    %1367 = vmatpush1.bf16.msra.mxu0 0
    %1368 = vmatprep.subr.bf16.mxu0 0
    %1369 = vmatpush1.bf16.msra.mxu0 0
    %1370 = vmatprep.subr.bf16.mxu0 0
    %1371 = vmatpush1.bf16.msra.mxu0 0
    %1372 = vmatprep.subr.bf16.mxu0 0
    %1373 = vmatpush1.bf16.msra.mxu0 0
    %1374 = vmatprep.subr.bf16.mxu0 0
    %1375 = vmatpush1.bf16.msra.mxu0 0
    %1376 = vmatprep.subr.bf16.mxu0 0
    %1377 = vmatpush1.bf16.msra.mxu0 0
    %1378 = vmatprep.subr.bf16.mxu0 0
    %1379 = vmatpush1.bf16.msra.mxu0 0
    %1380 = vmatprep.subr.bf16.mxu0 0
    %1381 = vmatpush1.bf16.msra.mxu0 0
    %1382 = vmatprep.subr.bf16.mxu0 0
    %1383 = vmatpush1.bf16.msra.mxu0 0
    %1384 = vmatprep.subr.bf16.mxu0 0
    %1385 = vmatpush1.bf16.msra.mxu0 0
    %1386 = vmatprep.subr.bf16.mxu0 0
    %1387 = vmatpush1.bf16.msra.mxu0 0
    %1388 = vmatprep.subr.bf16.mxu0 0
    %1389 = vmatpush1.bf16.msra.mxu0 0
    %1390 = vmatprep.mubr.bf16.mxu0 0
    %1391 = vmatmul.mubr.bf16.gmra.mrb[0].mxu0 %v231
    %v1392 = vpop.f32.mrb[0].mxu0
    %v1393 = vadd.f32 0.0, %v1392
    %v1394 = vpop.f32.mrb[0].mxu0
    %v1395 = vpop.f32.mrb[0].mxu0
    %v1396 = vpop.f32.mrb[0].mxu0
    %1397 = vdwg.mxu0
    %v1398 = vsel %vm153, %v1258, 0
    %v1400 = vsel %vm153, %v1260, 0
    %v1402 = vsel %vm153, %v1262, 0
    %1404 = vmatprep.subr.bf16.mxu0 %v1243
    %1405 = vmatpush1.bf16.msra.mxu0 %v1240
    %1406 = vmatprep.subr.bf16.mxu0 %v1400
    %1407 = vmatpush1.bf16.msra.mxu0 %v1398
    %1408 = vmatprep.subr.bf16.mxu0 0
    %1409 = vmatpush1.bf16.msra.mxu0 0
    %1410 = vmatprep.subr.bf16.mxu0 0
    %1411 = vmatpush1.bf16.msra.mxu0 0
    %1412 = vmatprep.subr.bf16.mxu0 0
    %1413 = vmatpush1.bf16.msra.mxu0 0
    %1414 = vmatprep.subr.bf16.mxu0 0
    %1415 = vmatpush1.bf16.msra.mxu0 0
    %1416 = vmatprep.subr.bf16.mxu0 0
    %1417 = vmatpush1.bf16.msra.mxu0 0
    %1418 = vmatprep.subr.bf16.mxu0 0
    %1419 = vmatpush1.bf16.msra.mxu0 0
    %1420 = vmatprep.subr.bf16.mxu0 0
    %1421 = vmatpush1.bf16.msra.mxu0 0
    %1422 = vmatprep.subr.bf16.mxu0 0
    %1423 = vmatpush1.bf16.msra.mxu0 0
    %1424 = vmatprep.subr.bf16.mxu0 0
    %1425 = vmatpush1.bf16.msra.mxu0 0
    %1426 = vmatprep.subr.bf16.mxu0 0
    %1427 = vmatpush1.bf16.msra.mxu0 0
    %1428 = vmatprep.subr.bf16.mxu0 0
    %1429 = vmatpush1.bf16.msra.mxu0 0
    %1430 = vmatprep.subr.bf16.mxu0 0
    %1431 = vmatpush1.bf16.msra.mxu0 0
    %1432 = vmatprep.subr.bf16.mxu0 0
    %1433 = vmatpush1.bf16.msra.mxu0 0
    %1434 = vmatprep.subr.bf16.mxu0 0
    %1435 = vmatpush1.bf16.msra.mxu0 0
    %1436 = vmatprep.mubr.bf16.mxu0 0
    %1437 = vmatmul.mubr.bf16.gmra.mrb[0].mxu0 %v324
    %v1438 = vpop.f32.mrb[0].mxu0
    %v1439 = vadd.f32 %v1352, %v1438
    %v1440 = vpop.f32.mrb[0].mxu0
    %v1441 = vadd.f32 %v1354, %v1440
    %v1442 = vpop.f32.mrb[0].mxu0
    %v1443 = vpop.f32.mrb[0].mxu0
    %1444 = vdwg.mxu0
    %1445 = vmatprep.subr.bf16.mxu0 0
    %1446 = vmatpush1.bf16.msra.mxu0 %v1246
    %1447 = vmatprep.subr.bf16.mxu0 0
    %1448 = vmatpush1.bf16.msra.mxu0 %v1402
    %1449 = vmatprep.subr.bf16.mxu0 0
    %1450 = vmatpush1.bf16.msra.mxu0 0
    %1451 = vmatprep.subr.bf16.mxu0 0
    %1452 = vmatpush1.bf16.msra.mxu0 0
    %1453 = vmatprep.subr.bf16.mxu0 0
    %1454 = vmatpush1.bf16.msra.mxu0 0
    %1455 = vmatprep.subr.bf16.mxu0 0
    %1456 = vmatpush1.bf16.msra.mxu0 0
    %1457 = vmatprep.subr.bf16.mxu0 0
    %1458 = vmatpush1.bf16.msra.mxu0 0
    %1459 = vmatprep.subr.bf16.mxu0 0
    %1460 = vmatpush1.bf16.msra.mxu0 0
    %1461 = vmatprep.subr.bf16.mxu0 0
    %1462 = vmatpush1.bf16.msra.mxu0 0
    %1463 = vmatprep.subr.bf16.mxu0 0
    %1464 = vmatpush1.bf16.msra.mxu0 0
    %1465 = vmatprep.subr.bf16.mxu0 0
    %1466 = vmatpush1.bf16.msra.mxu0 0
    %1467 = vmatprep.subr.bf16.mxu0 0
    %1468 = vmatpush1.bf16.msra.mxu0 0
    %1469 = vmatprep.subr.bf16.mxu0 0
    %1470 = vmatpush1.bf16.msra.mxu0 0
    %1471 = vmatprep.subr.bf16.mxu0 0
    %1472 = vmatpush1.bf16.msra.mxu0 0
    %1473 = vmatprep.subr.bf16.mxu0 0
    %1474 = vmatpush1.bf16.msra.mxu0 0
    %1475 = vmatprep.subr.bf16.mxu0 0
    %1476 = vmatpush1.bf16.msra.mxu0 0
    %1477 = vmatprep.mubr.bf16.mxu0 0
    %1478 = vmatmul.mubr.bf16.gmra.mrb[0].mxu0 %v324
    %v1479 = vpop.f32.mrb[0].mxu0
    %v1480 = vadd.f32 %v1393, %v1479
    %v1481 = vpop.f32.mrb[0].mxu0
    %v1482 = vpop.f32.mrb[0].mxu0
    %v1483 = vpop.f32.mrb[0].mxu0
    %1484 = vdwg.mxu0
    %1485 = vrot.lane.b32.xlu0 %v1240, 84
    %v1486 = vpop.permute.xlu0 %1485
    %1487 = vrot.lane.b32.xlu0 %v1243, 84
    %v1488 = vpop.permute.xlu0 %1487
    %1489 = vrot.lane.b32.xlu0 %v1246, 84
    %v1490 = vpop.permute.xlu0 %1489
    %1491 = vrot.lane.b32.xlu0 %v1269, 84
    %v1492 = vpop.permute.xlu0 %1491
    %1493 = vrot.lane.b32.xlu0 %v1258, 84
    %v1494 = vpop.permute.xlu0 %1493
    %1495 = vrot.lane.b32.xlu0 %v1260, 84
    %v1496 = vpop.permute.xlu0 %1495
    %1497 = vrot.lane.b32.xlu0 %v1262, 84
    %v1498 = vpop.permute.xlu0 %1497
    %1499 = vrot.lane.b32.xlu0 %v1274, 84
    %v1500 = vpop.permute.xlu0 %1499
    %v1501 = vsel %vm431, %v1486, %v1488
    %v1502 = vsel %vm431, %v1488, %v1490
    %v1503 = vsel %vm431, %v1490, %v1492
    %v1504 = vsel %vm431, %v1494, %v1496
    %v1505 = vsel %vm431, %v1496, %v1498
    %v1506 = vsel %vm431, %v1498, %v1500
    %v1511 = vsel %vm153, %v1504, 0
    %v1514 = vsel %vm153, %v1505, 0
    %v1517 = vsel %vm153, %v1506, 0
    %1519 = vmatprep.subr.bf16.mxu0 %v1502
    %1520 = vmatpush1.bf16.msra.mxu0 %v1501
    %1521 = vmatprep.subr.bf16.mxu0 %v1514
    %1522 = vmatpush1.bf16.msra.mxu0 %v1511
    %1523 = vmatprep.subr.bf16.mxu0 0
    %1524 = vmatpush1.bf16.msra.mxu0 0
    %1525 = vmatprep.subr.bf16.mxu0 0
    %1526 = vmatpush1.bf16.msra.mxu0 0
    %1527 = vmatprep.subr.bf16.mxu0 0
    %1528 = vmatpush1.bf16.msra.mxu0 0
    %1529 = vmatprep.subr.bf16.mxu0 0
    %1530 = vmatpush1.bf16.msra.mxu0 0
    %1531 = vmatprep.subr.bf16.mxu0 0
    %1532 = vmatpush1.bf16.msra.mxu0 0
    %1533 = vmatprep.subr.bf16.mxu0 0
    %1534 = vmatpush1.bf16.msra.mxu0 0
    %1535 = vmatprep.subr.bf16.mxu0 0
    %1536 = vmatpush1.bf16.msra.mxu0 0
    %1537 = vmatprep.subr.bf16.mxu0 0
    %1538 = vmatpush1.bf16.msra.mxu0 0
    %1539 = vmatprep.subr.bf16.mxu0 0
    %1540 = vmatpush1.bf16.msra.mxu0 0
    %1541 = vmatprep.subr.bf16.mxu0 0
    %1542 = vmatpush1.bf16.msra.mxu0 0
    %1543 = vmatprep.subr.bf16.mxu0 0
    %1544 = vmatpush1.bf16.msra.mxu0 0
    %1545 = vmatprep.subr.bf16.mxu0 0
    %1546 = vmatpush1.bf16.msra.mxu0 0
    %1547 = vmatprep.subr.bf16.mxu0 0
    %1548 = vmatpush1.bf16.msra.mxu0 0
    %1549 = vmatprep.subr.bf16.mxu0 0
    %1550 = vmatpush1.bf16.msra.mxu0 0
    %1551 = vmatprep.mubr.bf16.mxu0 0
    %1552 = vmatmul.mubr.bf16.gmra.mrb[0].mxu0 %v442
    %v1553 = vpop.f32.mrb[0].mxu0
    %v1554 = vadd.f32 0.0, %v1553
    %v1555 = vpop.f32.mrb[0].mxu0
    %v1556 = vadd.f32 0.0, %v1555
    %v1557 = vpop.f32.mrb[0].mxu0
    %v1558 = vpop.f32.mrb[0].mxu0
    %1559 = vdwg.mxu0
    %1560 = vmatprep.subr.bf16.mxu0 0
    %1561 = vmatpush1.bf16.msra.mxu0 %v1503
    %1562 = vmatprep.subr.bf16.mxu0 0
    %1563 = vmatpush1.bf16.msra.mxu0 %v1517
    %1564 = vmatprep.subr.bf16.mxu0 0
    %1565 = vmatpush1.bf16.msra.mxu0 0
    %1566 = vmatprep.subr.bf16.mxu0 0
    %1567 = vmatpush1.bf16.msra.mxu0 0
    %1568 = vmatprep.subr.bf16.mxu0 0
    %1569 = vmatpush1.bf16.msra.mxu0 0
    %1570 = vmatprep.subr.bf16.mxu0 0
    %1571 = vmatpush1.bf16.msra.mxu0 0
    %1572 = vmatprep.subr.bf16.mxu0 0
    %1573 = vmatpush1.bf16.msra.mxu0 0
    %1574 = vmatprep.subr.bf16.mxu0 0
    %1575 = vmatpush1.bf16.msra.mxu0 0
    %1576 = vmatprep.subr.bf16.mxu0 0
    %1577 = vmatpush1.bf16.msra.mxu0 0
    %1578 = vmatprep.subr.bf16.mxu0 0
    %1579 = vmatpush1.bf16.msra.mxu0 0
    %1580 = vmatprep.subr.bf16.mxu0 0
    %1581 = vmatpush1.bf16.msra.mxu0 0
    %1582 = vmatprep.subr.bf16.mxu0 0
    %1583 = vmatpush1.bf16.msra.mxu0 0
    %1584 = vmatprep.subr.bf16.mxu0 0
    %1585 = vmatpush1.bf16.msra.mxu0 0
    %1586 = vmatprep.subr.bf16.mxu0 0
    %1587 = vmatpush1.bf16.msra.mxu0 0
    %1588 = vmatprep.subr.bf16.mxu0 0
    %1589 = vmatpush1.bf16.msra.mxu0 0
    %1590 = vmatprep.subr.bf16.mxu0 0
    %1591 = vmatpush1.bf16.msra.mxu0 0
    %1592 = vmatprep.mubr.bf16.mxu0 0
    %1593 = vmatmul.mubr.bf16.gmra.mrb[0].mxu0 %v442
    %v1594 = vpop.f32.mrb[0].mxu0
    %v1595 = vadd.f32 0.0, %v1594
    %v1596 = vpop.f32.mrb[0].mxu0
    %v1597 = vpop.f32.mrb[0].mxu0
    %v1598 = vpop.f32.mrb[0].mxu0
    %1599 = vdwg.mxu0
    %v1600 = vadd.f32 %v1439, %v1554
    %v1601 = vadd.f32 %v1441, %v1556
    %v1602 = vadd.f32 %v1480, %v1595
    %1603 = vrot.lane.b32.xlu0 %v1240, 62
    %v1604 = vpop.permute.xlu0 %1603
    %1605 = vrot.lane.b32.xlu0 %v1243, 62
    %v1606 = vpop.permute.xlu0 %1605
    %1607 = vrot.lane.b32.xlu0 %v1246, 62
    %v1608 = vpop.permute.xlu0 %1607
    %1609 = vrot.lane.b32.xlu0 %v1269, 62
    %v1610 = vpop.permute.xlu0 %1609
    %1611 = vrot.lane.b32.xlu0 %v1258, 62
    %v1612 = vpop.permute.xlu0 %1611
    %1613 = vrot.lane.b32.xlu0 %v1260, 62
    %v1614 = vpop.permute.xlu0 %1613
    %1615 = vrot.lane.b32.xlu0 %v1262, 62
    %v1616 = vpop.permute.xlu0 %1615
    %1617 = vrot.lane.b32.xlu0 %v1274, 62
    %v1618 = vpop.permute.xlu0 %1617
    %v1619 = vsel %vm555, %v1604, %v1606
    %v1620 = vsel %vm555, %v1606, %v1608
    %v1621 = vsel %vm555, %v1608, %v1610
    %v1622 = vsel %vm555, %v1612, %v1614
    %v1623 = vsel %vm555, %v1614, %v1616
    %v1624 = vsel %vm555, %v1616, %v1618
    %v1629 = vsel %vm153, %v1622, 0
    %v1632 = vsel %vm153, %v1623, 0
    %v1635 = vsel %vm153, %v1624, 0
    %1637 = vmatprep.subr.bf16.mxu0 %v1620
    %1638 = vmatpush1.bf16.msra.mxu0 %v1619
    %1639 = vmatprep.subr.bf16.mxu0 %v1632
    %1640 = vmatpush1.bf16.msra.mxu0 %v1629
    %1641 = vmatprep.subr.bf16.mxu0 0
    %1642 = vmatpush1.bf16.msra.mxu0 0
    %1643 = vmatprep.subr.bf16.mxu0 0
    %1644 = vmatpush1.bf16.msra.mxu0 0
    %1645 = vmatprep.subr.bf16.mxu0 0
    %1646 = vmatpush1.bf16.msra.mxu0 0
    %1647 = vmatprep.subr.bf16.mxu0 0
    %1648 = vmatpush1.bf16.msra.mxu0 0
    %1649 = vmatprep.subr.bf16.mxu0 0
    %1650 = vmatpush1.bf16.msra.mxu0 0
    %1651 = vmatprep.subr.bf16.mxu0 0
    %1652 = vmatpush1.bf16.msra.mxu0 0
    %1653 = vmatprep.subr.bf16.mxu0 0
    %1654 = vmatpush1.bf16.msra.mxu0 0
    %1655 = vmatprep.subr.bf16.mxu0 0
    %1656 = vmatpush1.bf16.msra.mxu0 0
    %1657 = vmatprep.subr.bf16.mxu0 0
    %1658 = vmatpush1.bf16.msra.mxu0 0
    %1659 = vmatprep.subr.bf16.mxu0 0
    %1660 = vmatpush1.bf16.msra.mxu0 0
    %1661 = vmatprep.subr.bf16.mxu0 0
    %1662 = vmatpush1.bf16.msra.mxu0 0
    %1663 = vmatprep.subr.bf16.mxu0 0
    %1664 = vmatpush1.bf16.msra.mxu0 0
    %1665 = vmatprep.subr.bf16.mxu0 0
    %1666 = vmatpush1.bf16.msra.mxu0 0
    %1667 = vmatprep.subr.bf16.mxu0 0
    %1668 = vmatpush1.bf16.msra.mxu0 0
    %1669 = vmatprep.mubr.bf16.mxu0 0
    %1670 = vmatmul.mubr.bf16.gmra.mrb[0].mxu0 %v566
    %v1671 = vpop.f32.mrb[0].mxu0
    %v1672 = vadd.f32 0.0, %v1671
    %v1673 = vpop.f32.mrb[0].mxu0
    %v1674 = vadd.f32 0.0, %v1673
    %v1675 = vpop.f32.mrb[0].mxu0
    %v1676 = vpop.f32.mrb[0].mxu0
    %1677 = vdwg.mxu0
    %1678 = vmatprep.subr.bf16.mxu0 0
    %1679 = vmatpush1.bf16.msra.mxu0 %v1621
    %1680 = vmatprep.subr.bf16.mxu0 0
    %1681 = vmatpush1.bf16.msra.mxu0 %v1635
    %1682 = vmatprep.subr.bf16.mxu0 0
    %1683 = vmatpush1.bf16.msra.mxu0 0
    %1684 = vmatprep.subr.bf16.mxu0 0
    %1685 = vmatpush1.bf16.msra.mxu0 0
    %1686 = vmatprep.subr.bf16.mxu0 0
    %1687 = vmatpush1.bf16.msra.mxu0 0
    %1688 = vmatprep.subr.bf16.mxu0 0
    %1689 = vmatpush1.bf16.msra.mxu0 0
    %1690 = vmatprep.subr.bf16.mxu0 0
    %1691 = vmatpush1.bf16.msra.mxu0 0
    %1692 = vmatprep.subr.bf16.mxu0 0
    %1693 = vmatpush1.bf16.msra.mxu0 0
    %1694 = vmatprep.subr.bf16.mxu0 0
    %1695 = vmatpush1.bf16.msra.mxu0 0
    %1696 = vmatprep.subr.bf16.mxu0 0
    %1697 = vmatpush1.bf16.msra.mxu0 0
    %1698 = vmatprep.subr.bf16.mxu0 0
    %1699 = vmatpush1.bf16.msra.mxu0 0
    %1700 = vmatprep.subr.bf16.mxu0 0
    %1701 = vmatpush1.bf16.msra.mxu0 0
    %1702 = vmatprep.subr.bf16.mxu0 0
    %1703 = vmatpush1.bf16.msra.mxu0 0
    %1704 = vmatprep.subr.bf16.mxu0 0
    %1705 = vmatpush1.bf16.msra.mxu0 0
    %1706 = vmatprep.subr.bf16.mxu0 0
    %1707 = vmatpush1.bf16.msra.mxu0 0
    %1708 = vmatprep.subr.bf16.mxu0 0
    %1709 = vmatpush1.bf16.msra.mxu0 0
    %1710 = vmatprep.mubr.bf16.mxu0 0
    %1711 = vmatmul.mubr.bf16.gmra.mrb[0].mxu0 %v566
    %v1712 = vpop.f32.mrb[0].mxu0
    %v1713 = vadd.f32 0.0, %v1712
    %v1714 = vpop.f32.mrb[0].mxu0
    %v1715 = vpop.f32.mrb[0].mxu0
    %v1716 = vpop.f32.mrb[0].mxu0
    %1717 = vdwg.mxu0
    %v1718 = vadd.f32 %v1600, %v1672
    %v1719 = vadd.f32 %v1601, %v1674
    %v1720 = vadd.f32 %v1602, %v1713
    %1721 = vrot.lane.b32.xlu0 %v1240, 40
    %v1722 = vpop.permute.xlu0 %1721
    %1723 = vrot.lane.b32.xlu0 %v1243, 40
    %v1724 = vpop.permute.xlu0 %1723
    %1725 = vrot.lane.b32.xlu0 %v1246, 40
    %v1726 = vpop.permute.xlu0 %1725
    %1727 = vrot.lane.b32.xlu0 %v1269, 40
    %v1728 = vpop.permute.xlu0 %1727
    %1729 = vrot.lane.b32.xlu0 %v1258, 40
    %v1730 = vpop.permute.xlu0 %1729
    %1731 = vrot.lane.b32.xlu0 %v1260, 40
    %v1732 = vpop.permute.xlu0 %1731
    %1733 = vrot.lane.b32.xlu0 %v1262, 40
    %v1734 = vpop.permute.xlu0 %1733
    %1735 = vrot.lane.b32.xlu0 %v1274, 40
    %v1736 = vpop.permute.xlu0 %1735
    %v1737 = vsel %vm685, %v1722, %v1724
    %v1738 = vsel %vm685, %v1724, %v1726
    %v1739 = vsel %vm685, %v1726, %v1728
    %v1740 = vsel %vm685, %v1730, %v1732
    %v1741 = vsel %vm685, %v1732, %v1734
    %v1742 = vsel %vm685, %v1734, %v1736
    %v1747 = vsel %vm153, %v1740, 0
    %v1750 = vsel %vm153, %v1741, 0
    %v1753 = vsel %vm153, %v1742, 0
    %1755 = vmatprep.subr.bf16.mxu0 %v1738
    %1756 = vmatpush1.bf16.msra.mxu0 %v1737
    %1757 = vmatprep.subr.bf16.mxu0 %v1750
    %1758 = vmatpush1.bf16.msra.mxu0 %v1747
    %1759 = vmatprep.subr.bf16.mxu0 0
    %1760 = vmatpush1.bf16.msra.mxu0 0
    %1761 = vmatprep.subr.bf16.mxu0 0
    %1762 = vmatpush1.bf16.msra.mxu0 0
    %1763 = vmatprep.subr.bf16.mxu0 0
    %1764 = vmatpush1.bf16.msra.mxu0 0
    %1765 = vmatprep.subr.bf16.mxu0 0
    %1766 = vmatpush1.bf16.msra.mxu0 0
    %1767 = vmatprep.subr.bf16.mxu0 0
    %1768 = vmatpush1.bf16.msra.mxu0 0
    %1769 = vmatprep.subr.bf16.mxu0 0
    %1770 = vmatpush1.bf16.msra.mxu0 0
    %1771 = vmatprep.subr.bf16.mxu0 0
    %1772 = vmatpush1.bf16.msra.mxu0 0
    %1773 = vmatprep.subr.bf16.mxu0 0
    %1774 = vmatpush1.bf16.msra.mxu0 0
    %1775 = vmatprep.subr.bf16.mxu0 0
    %1776 = vmatpush1.bf16.msra.mxu0 0
    %1777 = vmatprep.subr.bf16.mxu0 0
    %1778 = vmatpush1.bf16.msra.mxu0 0
    %1779 = vmatprep.subr.bf16.mxu0 0
    %1780 = vmatpush1.bf16.msra.mxu0 0
    %1781 = vmatprep.subr.bf16.mxu0 0
    %1782 = vmatpush1.bf16.msra.mxu0 0
    %1783 = vmatprep.subr.bf16.mxu0 0
    %1784 = vmatpush1.bf16.msra.mxu0 0
    %1785 = vmatprep.subr.bf16.mxu0 0
    %1786 = vmatpush1.bf16.msra.mxu0 0
    %1787 = vmatprep.mubr.bf16.mxu0 0
    %1788 = vmatmul.mubr.bf16.gmra.mrb[0].mxu0 %v696
    %v1789 = vpop.f32.mrb[0].mxu0
    %v1790 = vadd.f32 0.0, %v1789
    %v1791 = vpop.f32.mrb[0].mxu0
    %v1792 = vadd.f32 0.0, %v1791
    %v1793 = vpop.f32.mrb[0].mxu0
    %v1794 = vpop.f32.mrb[0].mxu0
    %1795 = vdwg.mxu0
    %1796 = vmatprep.subr.bf16.mxu0 0
    %1797 = vmatpush1.bf16.msra.mxu0 %v1739
    %1798 = vmatprep.subr.bf16.mxu0 0
    %1799 = vmatpush1.bf16.msra.mxu0 %v1753
    %1800 = vmatprep.subr.bf16.mxu0 0
    %1801 = vmatpush1.bf16.msra.mxu0 0
    %1802 = vmatprep.subr.bf16.mxu0 0
    %1803 = vmatpush1.bf16.msra.mxu0 0
    %1804 = vmatprep.subr.bf16.mxu0 0
    %1805 = vmatpush1.bf16.msra.mxu0 0
    %1806 = vmatprep.subr.bf16.mxu0 0
    %1807 = vmatpush1.bf16.msra.mxu0 0
    %1808 = vmatprep.subr.bf16.mxu0 0
    %1809 = vmatpush1.bf16.msra.mxu0 0
    %1810 = vmatprep.subr.bf16.mxu0 0
    %1811 = vmatpush1.bf16.msra.mxu0 0
    %1812 = vmatprep.subr.bf16.mxu0 0
    %1813 = vmatpush1.bf16.msra.mxu0 0
    %1814 = vmatprep.subr.bf16.mxu0 0
    %1815 = vmatpush1.bf16.msra.mxu0 0
    %1816 = vmatprep.subr.bf16.mxu0 0
    %1817 = vmatpush1.bf16.msra.mxu0 0
    %1818 = vmatprep.subr.bf16.mxu0 0
    %1819 = vmatpush1.bf16.msra.mxu0 0
    %1820 = vmatprep.subr.bf16.mxu0 0
    %1821 = vmatpush1.bf16.msra.mxu0 0
    %1822 = vmatprep.subr.bf16.mxu0 0
    %1823 = vmatpush1.bf16.msra.mxu0 0
    %1824 = vmatprep.subr.bf16.mxu0 0
    %1825 = vmatpush1.bf16.msra.mxu0 0
    %1826 = vmatprep.subr.bf16.mxu0 0
    %1827 = vmatpush1.bf16.msra.mxu0 0
    %1828 = vmatprep.mubr.bf16.mxu0 0
    %1829 = vmatmul.mubr.bf16.gmra.mrb[0].mxu0 %v696
    %v1830 = vpop.f32.mrb[0].mxu0
    %v1831 = vadd.f32 0.0, %v1830
    %v1832 = vpop.f32.mrb[0].mxu0
    %v1833 = vpop.f32.mrb[0].mxu0
    %v1834 = vpop.f32.mrb[0].mxu0
    %1835 = vdwg.mxu0
    %v1836 = vadd.f32 %v1718, %v1790
    %v1837 = vadd.f32 %v1719, %v1792
    %v1838 = vadd.f32 %v1720, %v1831
    %1839 = vrot.lane.b32.xlu0 %v1240, 18
    %v1840 = vpop.permute.xlu0 %1839
    %1841 = vrot.lane.b32.xlu0 %v1243, 18
    %v1842 = vpop.permute.xlu0 %1841
    %1843 = vrot.lane.b32.xlu0 %v1246, 18
    %v1844 = vpop.permute.xlu0 %1843
    %1845 = vrot.lane.b32.xlu0 %v1269, 18
    %v1846 = vpop.permute.xlu0 %1845
    %1847 = vrot.lane.b32.xlu0 %v1258, 18
    %v1848 = vpop.permute.xlu0 %1847
    %1849 = vrot.lane.b32.xlu0 %v1260, 18
    %v1850 = vpop.permute.xlu0 %1849
    %1851 = vrot.lane.b32.xlu0 %v1262, 18
    %v1852 = vpop.permute.xlu0 %1851
    %1853 = vrot.lane.b32.xlu0 %v1274, 18
    %v1854 = vpop.permute.xlu0 %1853
    %v1855 = vsel %vm809, %v1840, %v1842
    %v1856 = vsel %vm809, %v1842, %v1844
    %v1857 = vsel %vm809, %v1844, %v1846
    %v1858 = vsel %vm809, %v1848, %v1850
    %v1859 = vsel %vm809, %v1850, %v1852
    %v1860 = vsel %vm809, %v1852, %v1854
    %v1865 = vsel %vm153, %v1858, 0
    %v1868 = vsel %vm153, %v1859, 0
    %v1871 = vsel %vm153, %v1860, 0
    %1873 = vmatprep.subr.bf16.mxu0 %v1856
    %1874 = vmatpush1.bf16.msra.mxu0 %v1855
    %1875 = vmatprep.subr.bf16.mxu0 %v1868
    %1876 = vmatpush1.bf16.msra.mxu0 %v1865
    %1877 = vmatprep.subr.bf16.mxu0 0
    %1878 = vmatpush1.bf16.msra.mxu0 0
    %1879 = vmatprep.subr.bf16.mxu0 0
    %1880 = vmatpush1.bf16.msra.mxu0 0
    %1881 = vmatprep.subr.bf16.mxu0 0
    %1882 = vmatpush1.bf16.msra.mxu0 0
    %1883 = vmatprep.subr.bf16.mxu0 0
    %1884 = vmatpush1.bf16.msra.mxu0 0
    %1885 = vmatprep.subr.bf16.mxu0 0
    %1886 = vmatpush1.bf16.msra.mxu0 0
    %1887 = vmatprep.subr.bf16.mxu0 0
    %1888 = vmatpush1.bf16.msra.mxu0 0
    %1889 = vmatprep.subr.bf16.mxu0 0
    %1890 = vmatpush1.bf16.msra.mxu0 0
    %1891 = vmatprep.subr.bf16.mxu0 0
    %1892 = vmatpush1.bf16.msra.mxu0 0
    %1893 = vmatprep.subr.bf16.mxu0 0
    %1894 = vmatpush1.bf16.msra.mxu0 0
    %1895 = vmatprep.subr.bf16.mxu0 0
    %1896 = vmatpush1.bf16.msra.mxu0 0
    %1897 = vmatprep.subr.bf16.mxu0 0
    %1898 = vmatpush1.bf16.msra.mxu0 0
    %1899 = vmatprep.subr.bf16.mxu0 0
    %1900 = vmatpush1.bf16.msra.mxu0 0
    %1901 = vmatprep.subr.bf16.mxu0 0
    %1902 = vmatpush1.bf16.msra.mxu0 0
    %1903 = vmatprep.subr.bf16.mxu0 0
    %1904 = vmatpush1.bf16.msra.mxu0 0
    %1905 = vmatprep.mubr.bf16.mxu0 0
    %1906 = vmatmul.mubr.bf16.gmra.mrb[0].mxu0 %v820
    %v1907 = vpop.f32.mrb[0].mxu0
    %v1908 = vadd.f32 0.0, %v1907
    %v1909 = vpop.f32.mrb[0].mxu0
    %v1910 = vadd.f32 0.0, %v1909
    %v1911 = vpop.f32.mrb[0].mxu0
    %v1912 = vpop.f32.mrb[0].mxu0
    %1913 = vdwg.mxu0
    %1914 = vmatprep.subr.bf16.mxu0 0
    %1915 = vmatpush1.bf16.msra.mxu0 %v1857
    %1916 = vmatprep.subr.bf16.mxu0 0
    %1917 = vmatpush1.bf16.msra.mxu0 %v1871
    %1918 = vmatprep.subr.bf16.mxu0 0
    %1919 = vmatpush1.bf16.msra.mxu0 0
    %1920 = vmatprep.subr.bf16.mxu0 0
    %1921 = vmatpush1.bf16.msra.mxu0 0
    %1922 = vmatprep.subr.bf16.mxu0 0
    %1923 = vmatpush1.bf16.msra.mxu0 0
    %1924 = vmatprep.subr.bf16.mxu0 0
    %1925 = vmatpush1.bf16.msra.mxu0 0
    %1926 = vmatprep.subr.bf16.mxu0 0
    %1927 = vmatpush1.bf16.msra.mxu0 0
    %1928 = vmatprep.subr.bf16.mxu0 0
    %1929 = vmatpush1.bf16.msra.mxu0 0
    %1930 = vmatprep.subr.bf16.mxu0 0
    %1931 = vmatpush1.bf16.msra.mxu0 0
    %1932 = vmatprep.subr.bf16.mxu0 0
    %1933 = vmatpush1.bf16.msra.mxu0 0
    %1934 = vmatprep.subr.bf16.mxu0 0
    %1935 = vmatpush1.bf16.msra.mxu0 0
    %1936 = vmatprep.subr.bf16.mxu0 0
    %1937 = vmatpush1.bf16.msra.mxu0 0
    %1938 = vmatprep.subr.bf16.mxu0 0
    %1939 = vmatpush1.bf16.msra.mxu0 0
    %1940 = vmatprep.subr.bf16.mxu0 0
    %1941 = vmatpush1.bf16.msra.mxu0 0
    %1942 = vmatprep.subr.bf16.mxu0 0
    %1943 = vmatpush1.bf16.msra.mxu0 0
    %1944 = vmatprep.subr.bf16.mxu0 0
    %1945 = vmatpush1.bf16.msra.mxu0 0
    %1946 = vmatprep.mubr.bf16.mxu0 0
    %1947 = vmatmul.mubr.bf16.gmra.mrb[0].mxu0 %v820
    %v1948 = vpop.f32.mrb[0].mxu0
    %v1949 = vadd.f32 0.0, %v1948
    %v1950 = vpop.f32.mrb[0].mxu0
    %v1951 = vpop.f32.mrb[0].mxu0
    %v1952 = vpop.f32.mrb[0].mxu0
    %1953 = vdwg.mxu0
    %v1954 = vadd.f32 %v1836, %v1908
    %v1955 = vadd.f32 %v1837, %v1910
    %v1956 = vadd.f32 %v1838, %v1949
    %v1959 = vunpack.c.l.s4 1983009808
    %v1960 = vunpack.c.0.s8 %v1959
    %v1961 = vlaneseq
    %v1962 = vshrl.u32 %v1961, 7
    %v1963 = vsub.s32 %v1960, %v1962
    %v1964 = vrot.slane %v1127, %v1963
    %1965 = vrot.lane.b32.xlu0 %v1964, 124
    %v1966 = vpop.permute.xlu0 %1965
    %v1967 = vsel %vm108, %v1198, %v1966
    %v1968 = vcombine.low %v1127, %v1127
    %v1970 = vunpack.c.l.s4 1983009808
    %v1971 = vunpack.c.0.s8 %v1970
    %v1972 = vlaneseq
    %v1973 = vshrl.u32 %v1972, 7
    %v1974 = vsub.s32 %v1971, %v1973
    %v1975 = vrot.slane %v1968, %v1974
    %1976 = vrot.lane.b32.xlu0 %v1975, 123
    %v1977 = vpop.permute.xlu0 %1976
    %v1978 = vsel %vm120, %v1209, %v1977
    %v1979 = vcombine.low %v1964, %v1964
    %1980 = vrot.lane.b32.xlu0 %v1979, 122
    %v1981 = vpop.permute.xlu0 %1980
    %v1982 = vsel %vm132, %v1220, %v1981
    %v1983 = vcombine.low %v1975, %v1975
    %1984 = vrot.lane.b32.xlu0 %v1152, 121
    %v1985 = vpop.permute.xlu0 %1984
    %1986 = vrot.lane.b32.xlu0 %v1165, 121
    %v1987 = vpop.permute.xlu0 %1986
    %1988 = vrot.lane.b32.xlu0 %v1136, 121
    %v1989 = vpop.permute.xlu0 %1988
    %1990 = vrot.lane.b32.xlu0 %v1983, 121
    %v1991 = vpop.permute.xlu0 %1990
    %v1992 = vsel %vm950, %v1985, %v1987
    %v1993 = vsel %vm950, %v1987, %v1989
    %v1994 = vsel %vm950, %v1989, %v1991
    %1995 = vrot.lane.b32.xlu0 %v1144, 120
    %v1996 = vpop.permute.xlu0 %1995
    %1997 = vrot.lane.b32.xlu0 %v1143, 120
    %v1998 = vpop.permute.xlu0 %1997
    %1999 = vrot.lane.b32.xlu0 %v1190, 120
    %v2000 = vpop.permute.xlu0 %1999
    %2001 = vrot.lane.b32.xlu0 %v1964, 120
    %v2002 = vpop.permute.xlu0 %2001
    %v2003 = vsel %vm962, %v1996, %v1998
    %v2004 = vsel %vm962, %v1998, %v2000
    %v2005 = vsel %vm962, %v2000, %v2002
    %2006 = vrot.lane.b32.xlu0 %v1153, 119
    %v2007 = vpop.permute.xlu0 %2006
    %2008 = vrot.lane.b32.xlu0 %v1136, 119
    %v2009 = vpop.permute.xlu0 %2008
    %2010 = vrot.lane.b32.xlu0 %v1144, 119
    %v2011 = vpop.permute.xlu0 %2010
    %2012 = vrot.lane.b32.xlu0 %v1975, 119
    %v2013 = vpop.permute.xlu0 %2012
    %v2014 = vsel %vm974, %v2007, %v2009
    %v2015 = vsel %vm974, %v2009, %v2011
    %v2016 = vsel %vm974, %v2011, %v2013
    %2017 = vrot.lane.b32.xlu0 %v1136, 118
    %v2018 = vpop.permute.xlu0 %2017
    %2019 = vrot.lane.b32.xlu0 %v1166, 118
    %v2020 = vpop.permute.xlu0 %2019
    %2021 = vrot.lane.b32.xlu0 %v1143, 118
    %v2022 = vpop.permute.xlu0 %2021
    %2023 = vrot.lane.b32.xlu0 %v1979, 118
    %v2024 = vpop.permute.xlu0 %2023
    %v2025 = vsel %vm986, %v2018, %v2020
    %v2026 = vsel %vm986, %v2020, %v2022
    %v2027 = vsel %vm986, %v2022, %v2024
    %v2030 = vsel %vm136, %v1967, %v1978
    %v2032 = vsel %vm146, %v2030, %v1982
    %v2034 = vsel %vm153, %v1260, %v1992
    %v2037 = vsel %vm153, %v1262, %v1993
    %v2040 = vsel %vm153, %v2032, %v1994
    %v2044 = vsel %vm136, %v2003, %v2014
    %v2047 = vsel %vm136, %v2004, %v2015
    %v2050 = vsel %vm136, %v2005, %v2016
    %v2052 = vsel %vm146, %v2044, %v2025
    %v2054 = vsel %vm146, %v2047, %v2026
    %v2056 = vsel %vm146, %v2050, %v2027
    %v2057 = vsel %vm153, %v2052, 0
    %v2059 = vsel %vm153, %v2054, 0
    %v2061 = vsel %vm153, %v2056, 0
    %2063 = vmatprep.subr.bf16.mxu0 %v2037
    %2064 = vmatpush1.bf16.msra.mxu0 %v2034
    %2065 = vmatprep.subr.bf16.mxu0 %v2059
    %2066 = vmatpush1.bf16.msra.mxu0 %v2057
    %2067 = vmatprep.subr.bf16.mxu0 0
    %2068 = vmatpush1.bf16.msra.mxu0 0
    %2069 = vmatprep.subr.bf16.mxu0 0
    %2070 = vmatpush1.bf16.msra.mxu0 0
    %2071 = vmatprep.subr.bf16.mxu0 0
    %2072 = vmatpush1.bf16.msra.mxu0 0
    %2073 = vmatprep.subr.bf16.mxu0 0
    %2074 = vmatpush1.bf16.msra.mxu0 0
    %2075 = vmatprep.subr.bf16.mxu0 0
    %2076 = vmatpush1.bf16.msra.mxu0 0
    %2077 = vmatprep.subr.bf16.mxu0 0
    %2078 = vmatpush1.bf16.msra.mxu0 0
    %2079 = vmatprep.subr.bf16.mxu0 0
    %2080 = vmatpush1.bf16.msra.mxu0 0
    %2081 = vmatprep.subr.bf16.mxu0 0
    %2082 = vmatpush1.bf16.msra.mxu0 0
    %2083 = vmatprep.subr.bf16.mxu0 0
    %2084 = vmatpush1.bf16.msra.mxu0 0
    %2085 = vmatprep.subr.bf16.mxu0 0
    %2086 = vmatpush1.bf16.msra.mxu0 0
    %2087 = vmatprep.subr.bf16.mxu0 0
    %2088 = vmatpush1.bf16.msra.mxu0 0
    %2089 = vmatprep.subr.bf16.mxu0 0
    %2090 = vmatpush1.bf16.msra.mxu0 0
    %2091 = vmatprep.subr.bf16.mxu0 0
    %2092 = vmatpush1.bf16.msra.mxu0 0
    %2093 = vmatprep.subr.bf16.mxu0 0
    %2094 = vmatpush1.bf16.msra.mxu0 0
    %2095 = vmatprep.mubr.bf16.mxu0 0
    %2096 = vmatmul.mubr.bf16.gmra.mrb[0].mxu0 %v1022
    %v2097 = vpop.f32.mrb[0].mxu0
    %v2098 = vadd.f32 0.0, %v2097
    %v2099 = vpop.f32.mrb[0].mxu0
    %v2100 = vadd.f32 0.0, %v2099
    %v2101 = vpop.f32.mrb[0].mxu0
    %v2102 = vpop.f32.mrb[0].mxu0
    %2103 = vdwg.mxu0
    %2104 = vmatprep.subr.bf16.mxu0 0
    %2105 = vmatpush1.bf16.msra.mxu0 %v2040
    %2106 = vmatprep.subr.bf16.mxu0 0
    %2107 = vmatpush1.bf16.msra.mxu0 %v2061
    %2108 = vmatprep.subr.bf16.mxu0 0
    %2109 = vmatpush1.bf16.msra.mxu0 0
    %2110 = vmatprep.subr.bf16.mxu0 0
    %2111 = vmatpush1.bf16.msra.mxu0 0
    %2112 = vmatprep.subr.bf16.mxu0 0
    %2113 = vmatpush1.bf16.msra.mxu0 0
    %2114 = vmatprep.subr.bf16.mxu0 0
    %2115 = vmatpush1.bf16.msra.mxu0 0
    %2116 = vmatprep.subr.bf16.mxu0 0
    %2117 = vmatpush1.bf16.msra.mxu0 0
    %2118 = vmatprep.subr.bf16.mxu0 0
    %2119 = vmatpush1.bf16.msra.mxu0 0
    %2120 = vmatprep.subr.bf16.mxu0 0
    %2121 = vmatpush1.bf16.msra.mxu0 0
    %2122 = vmatprep.subr.bf16.mxu0 0
    %2123 = vmatpush1.bf16.msra.mxu0 0
    %2124 = vmatprep.subr.bf16.mxu0 0
    %2125 = vmatpush1.bf16.msra.mxu0 0
    %2126 = vmatprep.subr.bf16.mxu0 0
    %2127 = vmatpush1.bf16.msra.mxu0 0
    %2128 = vmatprep.subr.bf16.mxu0 0
    %2129 = vmatpush1.bf16.msra.mxu0 0
    %2130 = vmatprep.subr.bf16.mxu0 0
    %2131 = vmatpush1.bf16.msra.mxu0 0
    %2132 = vmatprep.subr.bf16.mxu0 0
    %2133 = vmatpush1.bf16.msra.mxu0 0
    %2134 = vmatprep.subr.bf16.mxu0 0
    %2135 = vmatpush1.bf16.msra.mxu0 0
    %2136 = vmatprep.mubr.bf16.mxu0 0
    %2137 = vmatmul.mubr.bf16.gmra.mrb[0].mxu0 %v1022
    %v2138 = vpop.f32.mrb[0].mxu0
    %v2139 = vadd.f32 0.0, %v2138
    %v2140 = vpop.f32.mrb[0].mxu0
    %v2141 = vpop.f32.mrb[0].mxu0
    %v2142 = vpop.f32.mrb[0].mxu0
    %2143 = vdwg.mxu0
    %v2144 = vadd.f32 %v1954, %v2098
    %v2145 = vadd.f32 %v1955, %v2100
    %v2146 = vadd.f32 %v1956, %v2139
    %v2147 = vadd.f32 %v2144, %v1117
    %v2148 = vadd.f32 %v2145, %v1117
    %v2149 = vadd.f32 %v2146, %v1117
    %s2150 = scalar_lea.vmem [#allocation5], 24
    %2151 = vst [vmem:[%s2150] sm:$0xff] %v2147
    %2152 = vst [vmem:[%s2150 + $0x8] sm:$0xff] %v2148
    %2153 = vst [vmem:[%s2150 + $0x10] sm:$0xff] %v2149
    // Predicated region
    $region18: #{tpu_custom_call.1} parent=1 // pred_check
      _
    $region19: #{tpu_custom_call.1} parent=1 // pred_check_branch
      %2155 = sbr.rel (0) target = $region21
    $region20: #{tpu_custom_call.1} parent=1 // pred_region
      %s2157 = ssub.s32 768, 768
      %2158 = vsyncadd [#allocation4], %s2157
      %s2159 = sshll.u32 [#allocation5], 4
      %s2160 = int_to_ptr.vmem [resolvable:$true] %s2159
      %2165 = dma.vmem_to_hbm [thread:$0]  %s2160, 768, %s3, [#allocation4], 384, 384, 24
    $region21: #{tpu_custom_call.1} parent=1 // pred_fallthru
      _
    // Predicated region
    $region22: #{tpu_custom_call.1} parent=1 // pred_check
      _
    $region23: #{tpu_custom_call.1} parent=1 // pred_check_branch
      %2167 = sbr.rel (0) target = $region25
    $region24: #{tpu_custom_call.1} parent=1 // pred_region
      %2168 = dma.done [#allocation4], 768
    $region25: #{tpu_custom_call.1} parent=1 // pred_fallthru
      _
    %2169 = vsyncpa [#allocation3], 1
    %2170 = vsyncpa [#allocation4], 1

</llo_original>
